<compile_context>
chip_gen: v5e
topology: v5e:2x2
jax: 0.10.0
libtpu: 0.0.40
codegen_flags: <defaults>
</compile_context>

<pallas_src>
import functools

import jax
import jax.numpy as jnp
from jax import lax
from jax.experimental import pallas as pl
from jax.experimental.pallas import tpu as pltpu


def _round_up(x, m):
    return -(-x // m) * m


def _group_masks(caps, dim, cd_pad, caps_pad):
    """G[i, j] = 1 iff padded lane i belongs to real capsule j (j*dim <= i <
    (j+1)*dim, i < caps*dim, j < caps). Built once in the wrapper (XLA)."""
    i = jnp.arange(cd_pad, dtype=jnp.int32)[:, None]
    j = jnp.arange(caps_pad, dtype=jnp.int32)[None, :]
    g = ((i >= j * dim) & (i < (j + 1) * dim) & (j < caps) & (i < caps * dim))
    g = g.astype(jnp.float32)
    return g, g.T


def _primary_caps_kernel(p_ref, w_ref, b_ref, g_ref, gt_ref, o_ref, acc_ref):
    # p_ref : (TM, TK)            bf16 im2col patch tile
    # w_ref : (TK, CD_pad)        bf16 fused conv weight tile (all capsules)
    # b_ref : (1, CD_pad)         f32 fused bias              (constant block)
    # g_ref : (CD_pad, CAPS_pad)  f32 group mask G            (constant block)
    # gt_ref: (CAPS_pad, CD_pad)  f32 group mask G^T          (constant block)
    # o_ref : (TM, CD_pad)        f32 squashed capsule vectors (lane-dense)
    # acc_ref: (TM, CD_pad)       f32 accumulator scratch
    k = pl.program_id(1)

    @pl.when(k == 0)
    def _():
        acc_ref[...] = jnp.zeros_like(acc_ref)

    # Conv-as-matmul partial product for ALL capsules; f32 accumulation.
    acc_ref[...] += jnp.dot(p_ref[...], w_ref[...],
                            preferred_element_type=jnp.float32)

    @pl.when(k == pl.num_programs(1) - 1)
    def _():
        s = acc_ref[...] + b_ref[...]                        # (TM, CD_pad)
        g = g_ref[...]                                       # (CD_pad, CAPS_pad)
        gt = gt_ref[...]                                     # (CAPS_pad, CD_pad)

        # Per-capsule squared magnitude on the MXU (keeps the D-group
        # reduction lane-dense, off the strided cross-lane path).
        mag_sq = jnp.dot(s * s, g, preferred_element_type=jnp.float32)

        # squash: vj = |s|^2/(1+|s|^2) * (s/|s| + 1e-9), via EUP rsqrt/recip.
        factor = mag_sq * pl.reciprocal(1.0 + mag_sq, approx=True)
        scale = factor * lax.rsqrt(mag_sq + 1e-12)           # robust 1/|s|

        # Expand per-capsule scalars back to caps*D lanes on the MXU.
        scale_full = jnp.dot(scale, gt, preferred_element_type=jnp.float32)
        eps_full = jnp.dot(factor * 1e-9, gt,
                           preferred_element_type=jnp.float32)

        o_ref[...] = (s * scale_full + eps_full).astype(o_ref.dtype)


def _im2col(x, K, stride):
    """x: (N, C, H, W) -> (N, Ho*Wo, C*K*K); column index = ci*K*K + kh*K + kw
    (matches PyTorch conv weight flattening)."""
    N, C, H, W = x.shape
    Ho = (H - K) // stride + 1
    Wo = (W - K) // stride + 1
    pieces = []
    for kh in range(K):
        for kw in range(K):
            pieces.append(
                x[:, :, kh: kh + stride * Ho: stride, kw: kw + stride * Wo: stride]
            )
    p = jnp.stack(pieces, axis=2)                 # (N, C, K*K, Ho, Wo)
    p = p.reshape(N, C * K * K, Ho, Wo)           # ci*K*K + kh*K + kw
    p = p.transpose(0, 2, 3, 1).reshape(N, Ho * Wo, C * K * K)
    return p, Ho, Wo


def primary_caps_forward(x, weight, bias, *, output_caps, output_dim,
                         kernel_size, stride, tile_m=256, tile_k=512,
                         compute_dtype=jnp.bfloat16):
    """x: (N, C_in, H, W) f32 (NCHW, like PyTorch).
    weight: (C_out, C_in, K, K) with C_out = output_caps * output_dim.
    bias: (C_out,). Returns (N, output_caps*H_out*W_out, output_dim) f32."""
    N, C_in, H, W = x.shape
    K = kernel_size
    caps, D = output_caps, output_dim
    CD = caps * D
    Kdim = C_in * K * K

    # TODO(synk): for canonical CapsNet shapes (K=9) gather patches in-kernel
    # from raw HBM (memory_space=pl.ANY + make_async_copy) instead of
    # materializing im2col, removing the extra HBM round trip.
    # im2col in the compute dtype: halves the materialized patch traffic.
    patches, Ho, Wo = _im2col(x.astype(compute_dtype), K, stride)  # (N, HW, Kdim)
    HW = Ho * Wo
    M = N * HW

    # --- Tiling / lane padding -------------------------------------------
    TM = min(tile_m, _round_up(M, 16))          # 16: bf16 sublane packing
    M_pad = _round_up(M, TM)
    TK = min(tile_k, _round_up(Kdim, 128))      # contraction tile (mult of 128)
    Kdim_pad = _round_up(Kdim, TK)
    CD_pad = _round_up(CD, 128)                 # lane-dense output columns
    CAPS_pad = _round_up(caps, 128)             # lane-dense per-capsule stats

    # Flatten N x HW into one M axis; zero-pad rows / contraction columns.
    p = patches.reshape(M, Kdim)
    p = jnp.pad(p, ((0, M_pad - M), (0, Kdim_pad - Kdim)))

    # Fused weight (Kdim_pad, CD_pad): column co = cap*D + d matches the patch
    # column order ci*K*K + kh*K + kw, so no per-capsule regrouping is needed.
    w_fused = weight.reshape(CD, Kdim).T                         # (Kdim, CD)
    w_fused = jnp.pad(w_fused, ((0, Kdim_pad - Kdim), (0, CD_pad - CD)))
    w_fused = w_fused.astype(compute_dtype)
    b_fused = jnp.pad(bias.reshape(1, CD).astype(jnp.float32),
                      ((0, 0), (0, CD_pad - CD)))                # (1, CD_pad)

    # Group masks hoisted out of the kernel body (built once, constant blocks).
    g, gt = _group_masks(caps, D, CD_pad, CAPS_pad)

    grid = (M_pad // TM, Kdim_pad // TK)

    # VMEM budget sized to the actual buffers (+ headroom for intermediates).
    est = (2 * TM * TK * 2                  # patch tiles, double-buffered bf16
           + 2 * TK * CD_pad * 2            # weight tiles, double-buffered bf16
           + 2 * TM * CD_pad * 4            # output tiles, double-buffered f32
           + TM * CD_pad * 4                # f32 accumulator scratch
           + 2 * 2 * CD_pad * CAPS_pad * 4  # G / G^T (worst case 2 buffers)
           + 2 * CD_pad * 4)                # bias
    vmem_limit = int(min(max(2 * est + (8 << 20), 16 << 20), 64 << 20))

    cost = pl.CostEstimate(
        flops=int(2 * M_pad * Kdim_pad * CD_pad
                  + 3 * 2 * M_pad * CD_pad * CAPS_pad),
        transcendentals=int(2 * M_pad * CAPS_pad),
        bytes_accessed=int(M_pad * Kdim_pad * 2 + Kdim_pad * CD_pad * 2
                           + M_pad * CD_pad * 4
                           + 2 * CD_pad * CAPS_pad * 4 + CD_pad * 4),
    )

    def _run(buffered_consts):
        # Constant-index operands don't benefit from double-buffering; request
        # a single buffer when the running jax supports pipeline_mode.
        if buffered_consts:
            const_kw = dict(pipeline_mode=pl.Buffered(1))
        else:
            const_kw = {}
        grid_spec = pltpu.PrefetchScalarGridSpec(
            num_scalar_prefetch=0,
            grid=grid,
            in_specs=[
                pl.BlockSpec((TM, TK), lambda m, k: (m, k)),        # patches
                pl.BlockSpec((TK, CD_pad), lambda m, k: (k, 0)),    # weight
                pl.BlockSpec((1, CD_pad), lambda m, k: (0, 0), **const_kw),
                pl.BlockSpec((CD_pad, CAPS_pad), lambda m, k: (0, 0), **const_kw),
                pl.BlockSpec((CAPS_pad, CD_pad), lambda m, k: (0, 0), **const_kw),
            ],
            out_specs=pl.BlockSpec((TM, CD_pad), lambda m, k: (m, 0)),
            scratch_shapes=[pltpu.VMEM((TM, CD_pad), jnp.float32)],
        )
        return pl.pallas_call(
            _primary_caps_kernel,
            out_shape=jax.ShapeDtypeStruct((M_pad, CD_pad), jnp.float32),
            grid_spec=grid_spec,
            compiler_params=pltpu.CompilerParams(
                dimension_semantics=("parallel", "arbitrary"),
                vmem_limit_bytes=vmem_limit,
            ),
            cost_estimate=cost,
        )(p, w_fused, b_fused, g, gt)

    try:
        out = jax.block_until_ready(_run(True))
    except Exception:
        # Fallback if pl.Buffered(1) is unsupported on this jax/backend.
        out = _run(False)

    # Lane-dense kernel layout (M, caps*D) -> PyTorch layout (N, caps*HW, D).
    out = out[:M, :CD]
    out = out.reshape(N, HW, caps, D).transpose(0, 2, 1, 3).reshape(N, caps * HW, D)
    return out


def _reference(x, weight, bias, *, output_caps, output_dim, stride):
    out = lax.conv_general_dilated(
        x, weight, (stride, stride), "VALID",
        dimension_numbers=("NCHW", "OIHW", "NCHW"),
        precision=lax.Precision.HIGHEST,
    ) + bias[None, :, None, None]
    N, C, H, W = out.shape
    out = out.reshape(N, output_caps, output_dim, H, W)
    out = out.transpose(0, 1, 3, 4, 2).reshape(N, output_caps * H * W, output_dim)
    mag_sq = jnp.sum(out ** 2, axis=2, keepdims=True)
    mag = jnp.sqrt(mag_sq)
    return mag_sq / (1.0 + mag_sq) * (out / mag + 1e-09)


if __name__ == "__main__":
    # Small shapes consistent with the module.
    N, C_in, H, W = 2, 4, 16, 16
    output_caps, output_dim = 8, 4
    kernel_size, stride = 3, 2
    C_out = output_caps * output_dim

    key = jax.random.PRNGKey(0)
    kx, kw, kb = jax.random.split(key, 3)

    x = jax.random.normal(kx, (N, C_in, H, W), dtype=jnp.float32)

    # Deterministic Conv2d-style init (uniform in [-1/sqrt(fan_in), 1/sqrt(fan_in)]).
    fan_in = C_in * kernel_size * kernel_size
    bound = 1.0 / (fan_in ** 0.5)
    weight = jax.random.uniform(
        kw, (C_out, C_in, kernel_size, kernel_size),
        minval=-bound, maxval=bound, dtype=jnp.float32)
    bias = jax.random.uniform(kb, (C_out,), minval=-bound, maxval=bound,
                              dtype=jnp.float32)

    y = primary_caps_forward(
        x, weight, bias,
        output_caps=output_caps, output_dim=output_dim,
        kernel_size=kernel_size, stride=stride)
    y = jax.block_until_ready(y)

    # (a) Tight check vs a reference fed the same bf16-rounded inputs the MXU sees.
    xb = x.astype(jnp.bfloat16).astype(jnp.float32)
    wb = weight.astype(jnp.bfloat16).astype(jnp.float32)
    y_ref_bf16 = _reference(xb, wb, bias, output_caps=output_caps,
                            output_dim=output_dim, stride=stride)
    # (b) End-to-end check vs the pure-f32 module (tolerance covers bf16 inputs).
    y_ref_f32 = _reference(x, weight, bias, output_caps=output_caps,
                           output_dim=output_dim, stride=stride)

    assert y.shape == y_ref_f32.shape
    assert jnp.allclose(y, y_ref_bf16, atol=5e-3, rtol=5e-3), \
        "mismatch vs bf16-consistent reference"
    assert jnp.allclose(y, y_ref_f32, atol=3e-2, rtol=3e-2), \
        "mismatch vs f32 reference"

    print("KERNEL_OK")
</pallas_src>

<mosaic_0001>
module attributes {stable_mosaic.version = 11 : i64} {
  func.func @_primary_caps_kernel(%arg0: i32, %arg1: i32, %arg2: memref<112x128xbf16, #tpu.memory_space<vmem>>, %arg3: memref<128x128xbf16, #tpu.memory_space<vmem>>, %arg4: memref<1x128xf32, #tpu.memory_space<vmem>>, %arg5: memref<128x128xf32, #tpu.memory_space<vmem>>, %arg6: memref<128x128xf32, #tpu.memory_space<vmem>>, %arg7: memref<112x128xf32, #tpu.memory_space<vmem>>, %arg8: memref<112x128xf32, #tpu.memory_space<vmem>>) attributes {dimension_semantics = [#tpu.dimension_semantics<parallel>, #tpu.dimension_semantics<arbitrary>], iteration_bounds = array<i64: 1, 1>, scalar_prefetch = 0 : i64, scratch_operands = 1 : i64, tpu.core_type = #tpu.core_type<tc>, window_params = [{transform_indices = @transform_0, window_bounds = array<i64: 112, 128>}, {transform_indices = @transform_1, window_bounds = array<i64: 128, 128>}, {pipeline_mode = #tpu.pipeline_mode<synchronous>, transform_indices = @transform_2, window_bounds = array<i64: 1, 128>}, {pipeline_mode = #tpu.pipeline_mode<synchronous>, transform_indices = @transform_3, window_bounds = array<i64: 128, 128>}, {pipeline_mode = #tpu.pipeline_mode<synchronous>, transform_indices = @transform_4, window_bounds = array<i64: 128, 128>}, {transform_indices = @transform_5, window_bounds = array<i64: 112, 128>}]} {
    %c0_i32 = arith.constant 0 : i32
    %0 = arith.cmpi eq, %arg1, %c0_i32 : i32
    %1 = arith.extui %0 : i1 to i32
    %c0_i32_0 = arith.constant 0 : i32
    %2 = arith.cmpi ne, %1, %c0_i32_0 : i32
    scf.if %2 {
      %cst_10 = arith.constant 0.000000e+00 : f32
      %12 = vector.broadcast %cst_10 : f32 to vector<112x128xf32>
      %c0_11 = arith.constant 0 : index
      %c0_12 = arith.constant 0 : index
      %13 = vector.load %arg8[%c0_11, %c0_12] : memref<112x128xf32, #tpu.memory_space<vmem>>, vector<112x128xf32>
      tpu.vector_store %arg8[%c0_11, %c0_12], %12 {strides = array<i32>} : memref<112x128xf32, #tpu.memory_space<vmem>>, vector<112x128xf32>,
    } else {
    }
    %c0 = arith.constant 0 : index
    %c0_1 = arith.constant 0 : index
    %3 = vector.load %arg8[%c0, %c0_1] : memref<112x128xf32, #tpu.memory_space<vmem>>, vector<112x128xf32>
    %c0_2 = arith.constant 0 : index
    %c0_3 = arith.constant 0 : index
    %4 = vector.load %arg2[%c0_2, %c0_3] : memref<112x128xbf16, #tpu.memory_space<vmem>>, vector<112x128xbf16>
    %c0_4 = arith.constant 0 : index
    %c0_5 = arith.constant 0 : index
    %5 = vector.load %arg3[%c0_4, %c0_5] : memref<128x128xbf16, #tpu.memory_space<vmem>>, vector<128x128xbf16>
    %cst = arith.constant dense<0.000000e+00> : vector<112x128xf32>
    %6 = tpu.matmul %4, %5, %cst {dimension_numbers = #tpu.dot_dimension_numbers<[1], [0], [0], [1], [0, 0, 1, 1], [], []>} : vector<112x128xbf16>, vector<128x128xbf16>, vector<112x128xf32> -> vector<112x128xf32>
    %7 = arith.addf %3, %6 : vector<112x128xf32>
    %c0_6 = arith.constant 0 : index
    %c0_7 = arith.constant 0 : index
    %8 = vector.load %arg8[%c0_6, %c0_7] : memref<112x128xf32, #tpu.memory_space<vmem>>, vector<112x128xf32>
    tpu.vector_store %arg8[%c0_6, %c0_7], %7 {strides = array<i32>} : memref<112x128xf32, #tpu.memory_space<vmem>>, vector<112x128xf32>,
    %c0_i32_8 = arith.constant 0 : i32
    %9 = arith.cmpi eq, %arg1, %c0_i32_8 : i32
    %10 = arith.extui %9 : i1 to i32
    %c0_i32_9 = arith.constant 0 : i32
    %11 = arith.cmpi ne, %10, %c0_i32_9 : i32
    scf.if %11 {
      %c0_10 = arith.constant 0 : index
      %c0_11 = arith.constant 0 : index
      %12 = vector.load %arg8[%c0_10, %c0_11] : memref<112x128xf32, #tpu.memory_space<vmem>>, vector<112x128xf32>
      %c0_12 = arith.constant 0 : index
      %c0_13 = arith.constant 0 : index
      %13 = vector.load %arg4[%c0_12, %c0_13] : memref<1x128xf32, #tpu.memory_space<vmem>>, vector<1x128xf32>
      %14 = vector.broadcast %13 : vector<1x128xf32> to vector<112x128xf32>
      %15 = arith.addf %12, %14 : vector<112x128xf32>
      %c0_14 = arith.constant 0 : index
      %c0_15 = arith.constant 0 : index
      %16 = vector.load %arg5[%c0_14, %c0_15] : memref<128x128xf32, #tpu.memory_space<vmem>>, vector<128x128xf32>
      %c0_16 = arith.constant 0 : index
      %c0_17 = arith.constant 0 : index
      %17 = vector.load %arg6[%c0_16, %c0_17] : memref<128x128xf32, #tpu.memory_space<vmem>>, vector<128x128xf32>
      %18 = arith.mulf %15, %15 : vector<112x128xf32>
      %cst_18 = arith.constant dense<0.000000e+00> : vector<112x128xf32>
      %19 = tpu.matmul %18, %16, %cst_18 {dimension_numbers = #tpu.dot_dimension_numbers<[1], [0], [0], [1], [0, 0, 1, 1], [], []>} : vector<112x128xf32>, vector<128x128xf32>, vector<112x128xf32> -> vector<112x128xf32>
      %cst_19 = arith.constant 1.000000e+00 : f32
      %20 = vector.broadcast %cst_19 : f32 to vector<112x128xf32>
      %21 = arith.addf %20, %19 : vector<112x128xf32>
      %22 = tpu.reciprocal %21 {approx = true} : vector<112x128xf32> -> vector<112x128xf32>
      %23 = arith.mulf %19, %22 : vector<112x128xf32>
      %cst_20 = arith.constant 9.99999996E-13 : f32
      %24 = vector.broadcast %cst_20 : f32 to vector<112x128xf32>
      %25 = arith.addf %19, %24 : vector<112x128xf32>
      %26 = math.rsqrt %25 : vector<112x128xf32>
      %27 = arith.mulf %23, %26 : vector<112x128xf32>
      %cst_21 = arith.constant dense<0.000000e+00> : vector<112x128xf32>
      %28 = tpu.matmul %27, %17, %cst_21 {dimension_numbers = #tpu.dot_dimension_numbers<[1], [0], [0], [1], [0, 0, 1, 1], [], []>} : vector<112x128xf32>, vector<128x128xf32>, vector<112x128xf32> -> vector<112x128xf32>
      %cst_22 = arith.constant 9.99999971E-10 : f32
      %29 = vector.broadcast %cst_22 : f32 to vector<112x128xf32>
      %30 = arith.mulf %23, %29 : vector<112x128xf32>
      %cst_23 = arith.constant dense<0.000000e+00> : vector<112x128xf32>
      %31 = tpu.matmul %30, %17, %cst_23 {dimension_numbers = #tpu.dot_dimension_numbers<[1], [0], [0], [1], [0, 0, 1, 1], [], []>} : vector<112x128xf32>, vector<128x128xf32>, vector<112x128xf32> -> vector<112x128xf32>
      %32 = arith.mulf %15, %28 : vector<112x128xf32>
      %33 = arith.addf %32, %31 : vector<112x128xf32>
      %c0_24 = arith.constant 0 : index
      %c0_25 = arith.constant 0 : index
      %34 = vector.load %arg7[%c0_24, %c0_25] : memref<112x128xf32, #tpu.memory_space<vmem>>, vector<112x128xf32>
      tpu.vector_store %arg7[%c0_24, %c0_25], %33 {strides = array<i32>} : memref<112x128xf32, #tpu.memory_space<vmem>>, vector<112x128xf32>,
    } else {
    }
    return
  }
  func.func @transform_0(%arg0: i32, %arg1: i32) -> (i32, i32) {
    %c0_i32 = arith.constant 0 : i32
    return %arg0, %arg1 : i32, i32
  }
  func.func @transform_1(%arg0: i32, %arg1: i32) -> (i32, i32) {
    %c0_i32 = arith.constant 0 : i32
    %c0_i32_0 = arith.constant 0 : i32
    return %arg1, %c0_i32 : i32, i32
  }
  func.func @transform_2(%arg0: i32, %arg1: i32) -> (i32, i32) {
    %c0_i32 = arith.constant 0 : i32
    %c0_i32_0 = arith.constant 0 : i32
    %c0_i32_1 = arith.constant 0 : i32
    return %c0_i32, %c0_i32_0 : i32, i32
  }
  func.func @transform_3(%arg0: i32, %arg1: i32) -> (i32, i32) {
    %c0_i32 = arith.constant 0 : i32
    %c0_i32_0 = arith.constant 0 : i32
    %c0_i32_1 = arith.constant 0 : i32
    return %c0_i32, %c0_i32_0 : i32, i32
  }
  func.func @transform_4(%arg0: i32, %arg1: i32) -> (i32, i32) {
    %c0_i32 = arith.constant 0 : i32
    %c0_i32_0 = arith.constant 0 : i32
    %c0_i32_1 = arith.constant 0 : i32
    return %c0_i32, %c0_i32_0 : i32, i32
  }
  func.func @transform_5(%arg0: i32, %arg1: i32) -> (i32, i32) {
    %c0_i32 = arith.constant 0 : i32
    %c0_i32_0 = arith.constant 0 : i32
    return %arg0, %c0_i32 : i32, i32
  }
}

module attributes {stable_mosaic.version = 11 : i64} {
  func.func @_primary_caps_kernel(%arg0: i32, %arg1: i32, %arg2: memref<112x128xbf16, #tpu.memory_space<vmem>>, %arg3: memref<128x128xbf16, #tpu.memory_space<vmem>>, %arg4: memref<1x128xf32, #tpu.memory_space<vmem>>, %arg5: memref<128x128xf32, #tpu.memory_space<vmem>>, %arg6: memref<128x128xf32, #tpu.memory_space<vmem>>, %arg7: memref<112x128xf32, #tpu.memory_space<vmem>>, %arg8: memref<112x128xf32, #tpu.memory_space<vmem>>) attributes {dimension_semantics = [#tpu.dimension_semantics<parallel>, #tpu.dimension_semantics<arbitrary>], iteration_bounds = array<i64: 1, 1>, scalar_prefetch = 0 : i64, scratch_operands = 1 : i64, tpu.core_type = #tpu.core_type<tc>, window_params = [{transform_indices = @transform_0, window_bounds = array<i64: 112, 128>}, {transform_indices = @transform_1, window_bounds = array<i64: 128, 128>}, {pipeline_mode = #tpu.pipeline_mode<synchronous>, transform_indices = @transform_2, window_bounds = array<i64: 1, 128>}, {pipeline_mode = #tpu.pipeline_mode<synchronous>, transform_indices = @transform_3, window_bounds = array<i64: 128, 128>}, {pipeline_mode = #tpu.pipeline_mode<synchronous>, transform_indices = @transform_4, window_bounds = array<i64: 128, 128>}, {transform_indices = @transform_5, window_bounds = array<i64: 112, 128>}]} {
    %c0_i32 = arith.constant 0 : i32
    %0 = arith.cmpi eq, %arg1, %c0_i32 : i32
    %1 = arith.extui %0 : i1 to i32
    %c0_i32_0 = arith.constant 0 : i32
    %2 = arith.cmpi ne, %1, %c0_i32_0 : i32
    scf.if %2 {
      %cst_10 = arith.constant 0.000000e+00 : f32
      %12 = vector.broadcast %cst_10 : f32 to vector<112x128xf32>
      %c0_11 = arith.constant 0 : index
      %c0_12 = arith.constant 0 : index
      %13 = vector.load %arg8[%c0_11, %c0_12] : memref<112x128xf32, #tpu.memory_space<vmem>>, vector<112x128xf32>
      tpu.vector_store %arg8[%c0_11, %c0_12], %12 {strides = array<i32>} : memref<112x128xf32, #tpu.memory_space<vmem>>, vector<112x128xf32>,
    } else {
    }
    %c0 = arith.constant 0 : index
    %c0_1 = arith.constant 0 : index
    %3 = vector.load %arg8[%c0, %c0_1] : memref<112x128xf32, #tpu.memory_space<vmem>>, vector<112x128xf32>
    %c0_2 = arith.constant 0 : index
    %c0_3 = arith.constant 0 : index
    %4 = vector.load %arg2[%c0_2, %c0_3] : memref<112x128xbf16, #tpu.memory_space<vmem>>, vector<112x128xbf16>
    %c0_4 = arith.constant 0 : index
    %c0_5 = arith.constant 0 : index
    %5 = vector.load %arg3[%c0_4, %c0_5] : memref<128x128xbf16, #tpu.memory_space<vmem>>, vector<128x128xbf16>
    %cst = arith.constant dense<0.000000e+00> : vector<112x128xf32>
    %6 = tpu.matmul %4, %5, %cst {dimension_numbers = #tpu.dot_dimension_numbers<[1], [0], [0], [1], [0, 0, 1, 1], [], []>} : vector<112x128xbf16>, vector<128x128xbf16>, vector<112x128xf32> -> vector<112x128xf32>
    %7 = arith.addf %3, %6 : vector<112x128xf32>
    %c0_6 = arith.constant 0 : index
    %c0_7 = arith.constant 0 : index
    %8 = vector.load %arg8[%c0_6, %c0_7] : memref<112x128xf32, #tpu.memory_space<vmem>>, vector<112x128xf32>
    tpu.vector_store %arg8[%c0_6, %c0_7], %7 {strides = array<i32>} : memref<112x128xf32, #tpu.memory_space<vmem>>, vector<112x128xf32>,
    %c0_i32_8 = arith.constant 0 : i32
    %9 = arith.cmpi eq, %arg1, %c0_i32_8 : i32
    %10 = arith.extui %9 : i1 to i32
    %c0_i32_9 = arith.constant 0 : i32
    %11 = arith.cmpi ne, %10, %c0_i32_9 : i32
    scf.if %11 {
      %c0_10 = arith.constant 0 : index
      %c0_11 = arith.constant 0 : index
      %12 = vector.load %arg8[%c0_10, %c0_11] : memref<112x128xf32, #tpu.memory_space<vmem>>, vector<112x128xf32>
      %c0_12 = arith.constant 0 : index
      %c0_13 = arith.constant 0 : index
      %13 = vector.load %arg4[%c0_12, %c0_13] : memref<1x128xf32, #tpu.memory_space<vmem>>, vector<1x128xf32>
      %14 = vector.broadcast %13 : vector<1x128xf32> to vector<112x128xf32>
      %15 = arith.addf %12, %14 : vector<112x128xf32>
      %c0_14 = arith.constant 0 : index
      %c0_15 = arith.constant 0 : index
      %16 = vector.load %arg5[%c0_14, %c0_15] : memref<128x128xf32, #tpu.memory_space<vmem>>, vector<128x128xf32>
      %c0_16 = arith.constant 0 : index
      %c0_17 = arith.constant 0 : index
      %17 = vector.load %arg6[%c0_16, %c0_17] : memref<128x128xf32, #tpu.memory_space<vmem>>, vector<128x128xf32>
      %18 = arith.mulf %15, %15 : vector<112x128xf32>
      %cst_18 = arith.constant dense<0.000000e+00> : vector<112x128xf32>
      %19 = tpu.matmul %18, %16, %cst_18 {dimension_numbers = #tpu.dot_dimension_numbers<[1], [0], [0], [1], [0, 0, 1, 1], [], []>} : vector<112x128xf32>, vector<128x128xf32>, vector<112x128xf32> -> vector<112x128xf32>
      %cst_19 = arith.constant 1.000000e+00 : f32
      %20 = vector.broadcast %cst_19 : f32 to vector<112x128xf32>
      %21 = arith.addf %20, %19 : vector<112x128xf32>
      %22 = tpu.reciprocal %21 {approx = true} : vector<112x128xf32> -> vector<112x128xf32>
      %23 = arith.mulf %19, %22 : vector<112x128xf32>
      %cst_20 = arith.constant 9.99999996E-13 : f32
      %24 = vector.broadcast %cst_20 : f32 to vector<112x128xf32>
      %25 = arith.addf %19, %24 : vector<112x128xf32>
      %26 = math.rsqrt %25 : vector<112x128xf32>
      %27 = arith.mulf %23, %26 : vector<112x128xf32>
      %cst_21 = arith.constant dense<0.000000e+00> : vector<112x128xf32>
      %28 = tpu.matmul %27, %17, %cst_21 {dimension_numbers = #tpu.dot_dimension_numbers<[1], [0], [0], [1], [0, 0, 1, 1], [], []>} : vector<112x128xf32>, vector<128x128xf32>, vector<112x128xf32> -> vector<112x128xf32>
      %cst_22 = arith.constant 9.99999971E-10 : f32
      %29 = vector.broadcast %cst_22 : f32 to vector<112x128xf32>
      %30 = arith.mulf %23, %29 : vector<112x128xf32>
      %cst_23 = arith.constant dense<0.000000e+00> : vector<112x128xf32>
      %31 = tpu.matmul %30, %17, %cst_23 {dimension_numbers = #tpu.dot_dimension_numbers<[1], [0], [0], [1], [0, 0, 1, 1], [], []>} : vector<112x128xf32>, vector<128x128xf32>, vector<112x128xf32> -> vector<112x128xf32>
      %32 = arith.mulf %15, %28 : vector<112x128xf32>
      %33 = arith.addf %32, %31 : vector<112x128xf32>
      %c0_24 = arith.constant 0 : index
      %c0_25 = arith.constant 0 : index
      %34 = vector.load %arg7[%c0_24, %c0_25] : memref<112x128xf32, #tpu.memory_space<vmem>>, vector<112x128xf32>
      tpu.vector_store %arg7[%c0_24, %c0_25], %33 {strides = array<i32>} : memref<112x128xf32, #tpu.memory_space<vmem>>, vector<112x128xf32>,
    } else {
    }
    return
  }
  func.func @transform_0(%arg0: i32, %arg1: i32) -> (i32, i32) {
    %c0_i32 = arith.constant 0 : i32
    return %arg0, %arg1 : i32, i32
  }
  func.func @transform_1(%arg0: i32, %arg1: i32) -> (i32, i32) {
    %c0_i32 = arith.constant 0 : i32
    %c0_i32_0 = arith.constant 0 : i32
    return %arg1, %c0_i32 : i32, i32
  }
  func.func @transform_2(%arg0: i32, %arg1: i32) -> (i32, i32) {
    %c0_i32 = arith.constant 0 : i32
    %c0_i32_0 = arith.constant 0 : i32
    %c0_i32_1 = arith.constant 0 : i32
    return %c0_i32, %c0_i32_0 : i32, i32
  }
  func.func @transform_3(%arg0: i32, %arg1: i32) -> (i32, i32) {
    %c0_i32 = arith.constant 0 : i32
    %c0_i32_0 = arith.constant 0 : i32
    %c0_i32_1 = arith.constant 0 : i32
    return %c0_i32, %c0_i32_0 : i32, i32
  }
  func.func @transform_4(%arg0: i32, %arg1: i32) -> (i32, i32) {
    %c0_i32 = arith.constant 0 : i32
    %c0_i32_0 = arith.constant 0 : i32
    %c0_i32_1 = arith.constant 0 : i32
    return %c0_i32, %c0_i32_0 : i32, i32
  }
  func.func @transform_5(%arg0: i32, %arg1: i32) -> (i32, i32) {
    %c0_i32 = arith.constant 0 : i32
    %c0_i32_0 = arith.constant 0 : i32
    return %arg0, %c0_i32 : i32, i32
  }
}

</mosaic_0001>

<llo_original>
// kernel: tpu_custom_call.1
$region0: #{tpu_custom_call.1}
  #allocation0 [shape = 'u32[]', space=smem, size = 0x4, offset = 0x4, fixed_abs, tag = 'smem constant byte address 0x4 - core index']
  #allocation1 [shape = 'u32[72,128]{1,0:T(1,128)}', space=vmem, size = 0x9000, scoped, tag = 'internal scratch']
  #allocation2 [shape = 'f32[112,128]{1,0:T(8,128)}', space=vmem, size = 0xe000, scoped, tag = 'scratch operand']
  %s0 = inlined_call_operand.hbm [shape: bf16[112,128], index: 0, kind: input, shape index: {}]
  %s1 = inlined_call_operand.hbm [shape: bf16[128,128], index: 1, kind: input, shape index: {}]
  %s2 = inlined_call_operand.vmem [shape: f32[1,128], index: 2, kind: input, shape index: {}]
  %s3 = inlined_call_operand.hbm [shape: f32[128,128], index: 3, kind: input, shape index: {}]
  %s4 = inlined_call_operand.hbm [shape: f32[128,128], index: 4, kind: input, shape index: {}]
  %s5 = inlined_call_operand.hbm [shape: f32[112,128], index: 5, kind: output, shape index: {}]
  %s6 = sld [smem:[#allocation0]]
  $region54: #{tpu_custom_call.1} parent=0
    _
  %s8 = ssub.s32 1, %s6
  %s9 = scalar_select 0, %s8, %s6
  $region1: #{tpu_custom_call.1} parent=0
    #allocation3 [shape = 'u8[28672]{0}', space=vmem, size = 0x7000, scoped, tag = 'input window, operand 0, single buffered']
    #allocation4 [shape = 's32[1]{0}', space=sflag, size = 0x4, scoped, tag = 'scoped memory for tpu_custom_call.1']
    #allocation5 [shape = 's32[1]{0}', space=sflag, size = 0x4, scoped, tag = 'scoped memory for tpu_custom_call.1']
    #allocation6 [shape = 'u8[32768]{0}', space=vmem, size = 0x8000, scoped, tag = 'input window, operand 1, single buffered']
    #allocation7 [shape = 's32[1]{0}', space=sflag, size = 0x4, scoped, tag = 'scoped memory for tpu_custom_call.1']
    #allocation8 [shape = 'u8[65536]{0}', space=vmem, size = 0x10000, scoped, tag = 'input window, operand 3, single buffered']
    #allocation9 [shape = 'u8[65536]{0}', space=vmem, size = 0x10000, scoped, tag = 'input window, operand 4, single buffered']
    #allocation10 [shape = 's32[1]{0}', space=sflag, size = 0x4, scoped, tag = 'scoped memory for tpu_custom_call.1']
    #allocation11 [shape = 'u8[57344]{0}', space=vmem, size = 0xe000, scoped, tag = 'output window, operand 0, single buffered']
    %10 = vsyncpa [#allocation4], 0
    %11 = vsyncpa [#allocation7], 0
    %12 = vsyncpa [#allocation10], 0
    %13 = vsyncpa [#allocation5], 0
    // Predicated region
    $region2: #{tpu_custom_call.1} parent=1 // pred_check
      _
    $region3: #{tpu_custom_call.1} parent=1 // pred_check_branch
      %15 = sbr.rel (0) target = $region5
    $region4: #{tpu_custom_call.1} parent=1 // pred_region
      %17 = vsyncadd [#allocation4], 0
      %s18 = sshll.u32 %s0, 4
      %s19 = int_to_ptr.hbm [resolvable:$true] %s18
      %s20 = sshll.u32 [#allocation3], 4
      %s21 = int_to_ptr.vmem [resolvable:$true] %s20
      %26 = dma.hbm_to_vmem [thread:$0]  %s19, 896, %s21, [#allocation4], 64, 64, 4
    $region5: #{tpu_custom_call.1} parent=1 // pred_fallthru
      _
    // Predicated region
    $region6: #{tpu_custom_call.1} parent=1 // pred_check
      _
    $region7: #{tpu_custom_call.1} parent=1 // pred_check_branch
      %28 = sbr.rel (0) target = $region9
    $region8: #{tpu_custom_call.1} parent=1 // pred_region
      %30 = vsyncadd [#allocation7], 0
      %s31 = sshll.u32 %s1, 4
      %s32 = int_to_ptr.hbm [resolvable:$true] %s31
      %s33 = sshll.u32 [#allocation6], 4
      %s34 = int_to_ptr.vmem [resolvable:$true] %s33
      %39 = dma.hbm_to_vmem [thread:$0]  %s32, 1024, %s34, [#allocation7], 64, 64, 4
    $region9: #{tpu_custom_call.1} parent=1 // pred_fallthru
      _
    // Predicated region
    $region10: #{tpu_custom_call.1} parent=1 // pred_check
      _
    $region11: #{tpu_custom_call.1} parent=1 // pred_check_branch
      %41 = sbr.rel (0) target = $region13
    $region12: #{tpu_custom_call.1} parent=1 // pred_region
      _
    $region13: #{tpu_custom_call.1} parent=1 // pred_fallthru
      _
    // Predicated region
    $region14: #{tpu_custom_call.1} parent=1 // pred_check
      _
    $region15: #{tpu_custom_call.1} parent=1 // pred_check_branch
      %43 = sbr.rel (0) target = $region17
    $region16: #{tpu_custom_call.1} parent=1 // pred_region
      %45 = vsyncadd [#allocation7], 0
      %s46 = sshll.u32 %s3, 4
      %s47 = int_to_ptr.hbm [resolvable:$true] %s46
      %s48 = sshll.u32 [#allocation8], 4
      %s49 = int_to_ptr.vmem [resolvable:$true] %s48
      %54 = dma.hbm_to_vmem [thread:$0]  %s47, 2048, %s49, [#allocation7], 128, 128, 8
    $region17: #{tpu_custom_call.1} parent=1 // pred_fallthru
      _
    // Predicated region
    $region18: #{tpu_custom_call.1} parent=1 // pred_check
      _
    $region19: #{tpu_custom_call.1} parent=1 // pred_check_branch
      %56 = sbr.rel (0) target = $region21
    $region20: #{tpu_custom_call.1} parent=1 // pred_region
      %58 = vsyncadd [#allocation10], 0
      %s59 = sshll.u32 %s4, 4
      %s60 = int_to_ptr.hbm [resolvable:$true] %s59
      %s61 = sshll.u32 [#allocation9], 4
      %s62 = int_to_ptr.vmem [resolvable:$true] %s61
      %67 = dma.hbm_to_vmem [thread:$0]  %s60, 2048, %s62, [#allocation10], 128, 128, 8
    $region21: #{tpu_custom_call.1} parent=1 // pred_fallthru
      _
    // Predicated region
    $region22: #{tpu_custom_call.1} parent=1 // pred_check
      _
    $region23: #{tpu_custom_call.1} parent=1 // pred_check_branch
      %69 = sbr.rel (0) target = $region25
    $region24: #{tpu_custom_call.1} parent=1 // pred_region
      %71 = dma.done [#allocation4], 896
    $region25: #{tpu_custom_call.1} parent=1 // pred_fallthru
      _
    // Predicated region
    $region26: #{tpu_custom_call.1} parent=1 // pred_check
      _
    $region27: #{tpu_custom_call.1} parent=1 // pred_check_branch
      %73 = sbr.rel (0) target = $region29
    $region28: #{tpu_custom_call.1} parent=1 // pred_region
      %75 = dma.done [#allocation7], 1024
    $region29: #{tpu_custom_call.1} parent=1 // pred_fallthru
      _
    // Predicated region
    $region30: #{tpu_custom_call.1} parent=1 // pred_check
      _
    $region31: #{tpu_custom_call.1} parent=1 // pred_check_branch
      %77 = sbr.rel (0) target = $region33
    $region32: #{tpu_custom_call.1} parent=1 // pred_region
      %79 = dma.done [#allocation7], 2048
    $region33: #{tpu_custom_call.1} parent=1 // pred_fallthru
      _
    // Predicated region
    $region34: #{tpu_custom_call.1} parent=1 // pred_check
      _
    $region35: #{tpu_custom_call.1} parent=1 // pred_check_branch
      %81 = sbr.rel (0) target = $region37
    $region36: #{tpu_custom_call.1} parent=1 // pred_region
      %83 = dma.done [#allocation10], 2048
    $region37: #{tpu_custom_call.1} parent=1 // pred_fallthru
      _
    %p84 = scmp.eq.s32.totalorder 0, 0
    // Predicated region
    $region38: #{tpu_custom_call.1} parent=1 // pred_check
      %p85 = pneg %p84
    $region39: #{tpu_custom_call.1} parent=1 // pred_check_branch
      %87 = sbr.rel (%p85) target = $region41
    $region40: #{tpu_custom_call.1} parent=1 // pred_region
      %88 = vst [vmem:[#allocation2] sm:$0xff] 0.0
      %89 = vst [vmem:[#allocation2 + $0x8] sm:$0xff] 0.0
      %90 = vst [vmem:[#allocation2 + $0x10] sm:$0xff] 0.0
      %91 = vst [vmem:[#allocation2 + $0x18] sm:$0xff] 0.0
      %92 = vst [vmem:[#allocation2 + $0x20] sm:$0xff] 0.0
      %93 = vst [vmem:[#allocation2 + $0x28] sm:$0xff] 0.0
      %94 = vst [vmem:[#allocation2 + $0x30] sm:$0xff] 0.0
      %95 = vst [vmem:[#allocation2 + $0x38] sm:$0xff] 0.0
      %96 = vst [vmem:[#allocation2 + $0x40] sm:$0xff] 0.0
      %97 = vst [vmem:[#allocation2 + $0x48] sm:$0xff] 0.0
      %98 = vst [vmem:[#allocation2 + $0x50] sm:$0xff] 0.0
      %99 = vst [vmem:[#allocation2 + $0x58] sm:$0xff] 0.0
      %100 = vst [vmem:[#allocation2 + $0x60] sm:$0xff] 0.0
      %101 = vst [vmem:[#allocation2 + $0x68] sm:$0xff] 0.0
    $region41: #{tpu_custom_call.1} parent=1 // pred_fallthru
      _
    %v102 = vld [vmem:[#allocation2] sm:$0xff]
    %v103 = vld [vmem:[#allocation2 + $0x8] sm:$0xff]
    %v104 = vld [vmem:[#allocation2 + $0x10] sm:$0xff]
    %v105 = vld [vmem:[#allocation2 + $0x18] sm:$0xff]
    %v106 = vld [vmem:[#allocation2 + $0x20] sm:$0xff]
    %v107 = vld [vmem:[#allocation2 + $0x28] sm:$0xff]
    %v108 = vld [vmem:[#allocation2 + $0x30] sm:$0xff]
    %v109 = vld [vmem:[#allocation2 + $0x38] sm:$0xff]
    %v110 = vld [vmem:[#allocation2 + $0x40] sm:$0xff]
    %v111 = vld [vmem:[#allocation2 + $0x48] sm:$0xff]
    %v112 = vld [vmem:[#allocation2 + $0x50] sm:$0xff]
    %v113 = vld [vmem:[#allocation2 + $0x58] sm:$0xff]
    %v114 = vld [vmem:[#allocation2 + $0x60] sm:$0xff]
    %v115 = vld [vmem:[#allocation2 + $0x68] sm:$0xff]
    %v116 = vld [vmem:[#allocation3] sm:$0xf]
    %v117 = vld [vmem:[#allocation3 + $0x4] sm:$0xf]
    %v118 = vld [vmem:[#allocation3 + $0x8] sm:$0xf]
    %v119 = vld [vmem:[#allocation3 + $0xc] sm:$0xf]
    %v120 = vld [vmem:[#allocation3 + $0x10] sm:$0xf]
    %v121 = vld [vmem:[#allocation3 + $0x14] sm:$0xf]
    %v122 = vld [vmem:[#allocation3 + $0x18] sm:$0xf]
    %v123 = vld [vmem:[#allocation3 + $0x1c] sm:$0xf]
    %v124 = vld [vmem:[#allocation3 + $0x20] sm:$0xf]
    %v125 = vld [vmem:[#allocation3 + $0x24] sm:$0xf]
    %v126 = vld [vmem:[#allocation3 + $0x28] sm:$0xf]
    %v127 = vld [vmem:[#allocation3 + $0x2c] sm:$0xf]
    %v128 = vld [vmem:[#allocation3 + $0x30] sm:$0xf]
    %v129 = vld [vmem:[#allocation3 + $0x34] sm:$0xf]
    %v130 = vld [vmem:[#allocation6] sm:$0xf]
    %v131 = vld [vmem:[#allocation6 + $0x4] sm:$0xf]
    %v132 = vld [vmem:[#allocation6 + $0x8] sm:$0xf]
    %v133 = vld [vmem:[#allocation6 + $0xc] sm:$0xf]
    %v134 = vld [vmem:[#allocation6 + $0x10] sm:$0xf]
    %v135 = vld [vmem:[#allocation6 + $0x14] sm:$0xf]
    %v136 = vld [vmem:[#allocation6 + $0x18] sm:$0xf]
    %v137 = vld [vmem:[#allocation6 + $0x1c] sm:$0xf]
    %v138 = vld [vmem:[#allocation6 + $0x20] sm:$0xf]
    %v139 = vld [vmem:[#allocation6 + $0x24] sm:$0xf]
    %v140 = vld [vmem:[#allocation6 + $0x28] sm:$0xf]
    %v141 = vld [vmem:[#allocation6 + $0x2c] sm:$0xf]
    %v142 = vld [vmem:[#allocation6 + $0x30] sm:$0xf]
    %v143 = vld [vmem:[#allocation6 + $0x34] sm:$0xf]
    %v144 = vld [vmem:[#allocation6 + $0x38] sm:$0xf]
    %v145 = vld [vmem:[#allocation6 + $0x3c] sm:$0xf]
    %v160 = vunpack.c.l.b16 %v116
    %v161 = vunpack.c.l.b16 %v117
    %v162 = vunpack.c.l.b16 %v118
    %v163 = vunpack.c.l.b16 %v119
    %v164 = vunpack.c.l.b16 %v120
    %v165 = vunpack.c.l.b16 %v121
    %v166 = vunpack.c.l.b16 %v122
    %v167 = vunpack.c.l.b16 %v123
    %v168 = vunpack.c.l.b16 %v124
    %v169 = vunpack.c.l.b16 %v125
    %v170 = vunpack.c.l.b16 %v126
    %v171 = vunpack.c.l.b16 %v127
    %v172 = vunpack.c.l.b16 %v128
    %v173 = vunpack.c.l.b16 %v129
    %v174 = vpack.c.b16 %v161, %v160
    %v175 = vpack.c.b16 %v163, %v162
    %v176 = vpack.c.b16 %v165, %v164
    %v177 = vpack.c.b16 %v167, %v166
    %v178 = vpack.c.b16 %v169, %v168
    %v179 = vpack.c.b16 %v171, %v170
    %v180 = vpack.c.b16 %v173, %v172
    %v204 = vunpack.c.l.b16 %v130
    %v205 = vunpack.c.l.b16 %v131
    %v206 = vunpack.c.l.b16 %v132
    %v207 = vunpack.c.l.b16 %v133
    %v208 = vunpack.c.l.b16 %v134
    %v209 = vunpack.c.l.b16 %v135
    %v210 = vunpack.c.l.b16 %v136
    %v211 = vunpack.c.l.b16 %v137
    %v212 = vunpack.c.l.b16 %v138
    %v213 = vunpack.c.l.b16 %v139
    %v214 = vunpack.c.l.b16 %v140
    %v215 = vunpack.c.l.b16 %v141
    %v216 = vunpack.c.l.b16 %v142
    %v217 = vunpack.c.l.b16 %v143
    %v218 = vunpack.c.l.b16 %v144
    %v219 = vunpack.c.l.b16 %v145
    %v220 = vpack.c.b16 %v205, %v204
    %v221 = vpack.c.b16 %v207, %v206
    %v222 = vpack.c.b16 %v209, %v208
    %v223 = vpack.c.b16 %v211, %v210
    %v224 = vpack.c.b16 %v213, %v212
    %v225 = vpack.c.b16 %v215, %v214
    %v226 = vpack.c.b16 %v217, %v216
    %v227 = vpack.c.b16 %v219, %v218
    %236 = vmatpush.bf16.msra.mxu0 %v227
    %237 = vmatpush.bf16.msra.mxu0 %v226
    %238 = vmatpush.bf16.msra.mxu0 %v225
    %239 = vmatpush.bf16.msra.mxu0 %v224
    %240 = vmatpush.bf16.msra.mxu0 %v223
    %241 = vmatpush.bf16.msra.mxu0 %v222
    %242 = vmatpush.bf16.msra.mxu0 %v221
    %243 = vmatpush.bf16.msra.mxu0 %v220
    %244 = vmatmul.bf16.gmra.mxu0 %v174
    %v245 = vpop.f32.mrf.mxu0
    %v246 = vadd.f32 0.0, %v245
    %v247 = vpop.f32.mrf.mxu0
    %v248 = vadd.f32 0.0, %v247
    %249 = vmatmul.bf16.gmra.mxu0 %v175
    %v250 = vpop.f32.mrf.mxu0
    %v251 = vadd.f32 0.0, %v250
    %v252 = vpop.f32.mrf.mxu0
    %v253 = vadd.f32 0.0, %v252
    %254 = vmatmul.bf16.gmra.mxu0 %v176
    %v255 = vpop.f32.mrf.mxu0
    %v256 = vadd.f32 0.0, %v255
    %v257 = vpop.f32.mrf.mxu0
    %v258 = vadd.f32 0.0, %v257
    %259 = vmatmul.bf16.gmra.mxu0 %v177
    %v260 = vpop.f32.mrf.mxu0
    %v261 = vadd.f32 0.0, %v260
    %v262 = vpop.f32.mrf.mxu0
    %v263 = vadd.f32 0.0, %v262
    %264 = vmatmul.bf16.gmra.mxu0 %v178
    %v265 = vpop.f32.mrf.mxu0
    %v266 = vadd.f32 0.0, %v265
    %v267 = vpop.f32.mrf.mxu0
    %v268 = vadd.f32 0.0, %v267
    %269 = vmatmul.bf16.gmra.mxu0 %v179
    %v270 = vpop.f32.mrf.mxu0
    %v271 = vadd.f32 0.0, %v270
    %v272 = vpop.f32.mrf.mxu0
    %v273 = vadd.f32 0.0, %v272
    %274 = vmatmul.bf16.gmra.mxu0 %v180
    %v275 = vpop.f32.mrf.mxu0
    %v276 = vadd.f32 0.0, %v275
    %v277 = vpop.f32.mrf.mxu0
    %v278 = vadd.f32 0.0, %v277
    %279 = vdwg.mxu0
    %v280 = vadd.f32 %v102, %v246
    %v281 = vadd.f32 %v103, %v248
    %v282 = vadd.f32 %v104, %v251
    %v283 = vadd.f32 %v105, %v253
    %v284 = vadd.f32 %v106, %v256
    %v285 = vadd.f32 %v107, %v258
    %v286 = vadd.f32 %v108, %v261
    %v287 = vadd.f32 %v109, %v263
    %v288 = vadd.f32 %v110, %v266
    %v289 = vadd.f32 %v111, %v268
    %v290 = vadd.f32 %v112, %v271
    %v291 = vadd.f32 %v113, %v273
    %v292 = vadd.f32 %v114, %v276
    %v293 = vadd.f32 %v115, %v278
    %294 = vst [vmem:[#allocation2] sm:$0xff] %v280
    %295 = vst [vmem:[#allocation2 + $0x8] sm:$0xff] %v281
    %296 = vst [vmem:[#allocation2 + $0x10] sm:$0xff] %v282
    %297 = vst [vmem:[#allocation2 + $0x18] sm:$0xff] %v283
    %298 = vst [vmem:[#allocation2 + $0x20] sm:$0xff] %v284
    %299 = vst [vmem:[#allocation2 + $0x28] sm:$0xff] %v285
    %300 = vst [vmem:[#allocation2 + $0x30] sm:$0xff] %v286
    %301 = vst [vmem:[#allocation2 + $0x38] sm:$0xff] %v287
    %302 = vst [vmem:[#allocation2 + $0x40] sm:$0xff] %v288
    %303 = vst [vmem:[#allocation2 + $0x48] sm:$0xff] %v289
    %304 = vst [vmem:[#allocation2 + $0x50] sm:$0xff] %v290
    %305 = vst [vmem:[#allocation2 + $0x58] sm:$0xff] %v291
    %306 = vst [vmem:[#allocation2 + $0x60] sm:$0xff] %v292
    %307 = vst [vmem:[#allocation2 + $0x68] sm:$0xff] %v293
    // Predicated region
    $region42: #{tpu_custom_call.1} parent=1 // pred_check
      %p308 = pneg %p84
    $region43: #{tpu_custom_call.1} parent=1 // pred_check_branch
      %310 = sbr.rel (%p308) target = $region45
    $region44: #{tpu_custom_call.1} parent=1 // pred_region
      %v311 = vld [vmem:[#allocation2] sm:$0xff]
      %v312 = vld [vmem:[#allocation2 + $0x8] sm:$0xff]
      %v313 = vld [vmem:[#allocation2 + $0x10] sm:$0xff]
      %v314 = vld [vmem:[#allocation2 + $0x18] sm:$0xff]
      %v315 = vld [vmem:[#allocation2 + $0x20] sm:$0xff]
      %v316 = vld [vmem:[#allocation2 + $0x28] sm:$0xff]
      %v317 = vld [vmem:[#allocation2 + $0x30] sm:$0xff]
      %v318 = vld [vmem:[#allocation2 + $0x38] sm:$0xff]
      %v319 = vld [vmem:[#allocation2 + $0x40] sm:$0xff]
      %v320 = vld [vmem:[#allocation2 + $0x48] sm:$0xff]
      %v321 = vld [vmem:[#allocation2 + $0x50] sm:$0xff]
      %v322 = vld [vmem:[#allocation2 + $0x58] sm:$0xff]
      %v323 = vld [vmem:[#allocation2 + $0x60] sm:$0xff]
      %v324 = vld [vmem:[#allocation2 + $0x68] sm:$0xff]
      %v325 = vld [vmem:[%s2] sm:$0x1]
      %v327 = vperm.slane %v325, 0
      %v329 = vadd.f32 %v311, %v327
      %v330 = vadd.f32 %v312, %v327
      %v331 = vadd.f32 %v313, %v327
      %v332 = vadd.f32 %v314, %v327
      %v333 = vadd.f32 %v315, %v327
      %v334 = vadd.f32 %v316, %v327
      %v335 = vadd.f32 %v317, %v327
      %v336 = vadd.f32 %v318, %v327
      %v337 = vadd.f32 %v319, %v327
      %v338 = vadd.f32 %v320, %v327
      %v339 = vadd.f32 %v321, %v327
      %v340 = vadd.f32 %v322, %v327
      %v341 = vadd.f32 %v323, %v327
      %v342 = vadd.f32 %v324, %v327
      %v343 = vld [vmem:[#allocation8] sm:$0xff]
      %v344 = vld [vmem:[#allocation8 + $0x8] sm:$0xff]
      %v345 = vld [vmem:[#allocation8 + $0x10] sm:$0xff]
      %v346 = vld [vmem:[#allocation8 + $0x18] sm:$0xff]
      %v347 = vld [vmem:[#allocation8 + $0x20] sm:$0xff]
      %v348 = vld [vmem:[#allocation8 + $0x28] sm:$0xff]
      %v349 = vld [vmem:[#allocation8 + $0x30] sm:$0xff]
      %v350 = vld [vmem:[#allocation8 + $0x38] sm:$0xff]
      %v351 = vld [vmem:[#allocation8 + $0x40] sm:$0xff]
      %v352 = vld [vmem:[#allocation8 + $0x48] sm:$0xff]
      %v353 = vld [vmem:[#allocation8 + $0x50] sm:$0xff]
      %v354 = vld [vmem:[#allocation8 + $0x58] sm:$0xff]
      %v355 = vld [vmem:[#allocation8 + $0x60] sm:$0xff]
      %v356 = vld [vmem:[#allocation8 + $0x68] sm:$0xff]
      %v357 = vld [vmem:[#allocation8 + $0x70] sm:$0xff]
      %v358 = vld [vmem:[#allocation8 + $0x78] sm:$0xff]
      %v359 = vld [vmem:[#allocation9] sm:$0xff]
      %v360 = vld [vmem:[#allocation9 + $0x8] sm:$0xff]
      %v361 = vld [vmem:[#allocation9 + $0x10] sm:$0xff]
      %v362 = vld [vmem:[#allocation9 + $0x18] sm:$0xff]
      %v363 = vld [vmem:[#allocation9 + $0x20] sm:$0xff]
      %v364 = vld [vmem:[#allocation9 + $0x28] sm:$0xff]
      %v365 = vld [vmem:[#allocation9 + $0x30] sm:$0xff]
      %v366 = vld [vmem:[#allocation9 + $0x38] sm:$0xff]
      %v367 = vld [vmem:[#allocation9 + $0x40] sm:$0xff]
      %v368 = vld [vmem:[#allocation9 + $0x48] sm:$0xff]
      %v369 = vld [vmem:[#allocation9 + $0x50] sm:$0xff]
      %v370 = vld [vmem:[#allocation9 + $0x58] sm:$0xff]
      %v371 = vld [vmem:[#allocation9 + $0x60] sm:$0xff]
      %v372 = vld [vmem:[#allocation9 + $0x68] sm:$0xff]
      %v373 = vld [vmem:[#allocation9 + $0x70] sm:$0xff]
      %v374 = vld [vmem:[#allocation9 + $0x78] sm:$0xff]
      %v375 = vmul.f32 %v329, %v329
      %v376 = vmul.f32 %v330, %v330
      %v377 = vmul.f32 %v331, %v331
      %v378 = vmul.f32 %v332, %v332
      %v379 = vmul.f32 %v333, %v333
      %v380 = vmul.f32 %v334, %v334
      %v381 = vmul.f32 %v335, %v335
      %v382 = vmul.f32 %v336, %v336
      %v383 = vmul.f32 %v337, %v337
      %v384 = vmul.f32 %v338, %v338
      %v385 = vmul.f32 %v339, %v339
      %v386 = vmul.f32 %v340, %v340
      %v387 = vmul.f32 %v341, %v341
      %v388 = vmul.f32 %v342, %v342
      %389 = vmatpush.msra.mxu0 %v358
      %390 = vmatpush.msra.mxu0 %v357
      %391 = vmatpush.msra.mxu0 %v356
      %392 = vmatpush.msra.mxu0 %v355
      %393 = vmatpush.msra.mxu0 %v354
      %394 = vmatpush.msra.mxu0 %v353
      %395 = vmatpush.msra.mxu0 %v352
      %396 = vmatpush.msra.mxu0 %v351
      %397 = vmatpush.msra.mxu0 %v350
      %398 = vmatpush.msra.mxu0 %v349
      %399 = vmatpush.msra.mxu0 %v348
      %400 = vmatpush.msra.mxu0 %v347
      %401 = vmatpush.msra.mxu0 %v346
      %402 = vmatpush.msra.mxu0 %v345
      %403 = vmatpush.msra.mxu0 %v344
      %404 = vmatpush.msra.mxu0 %v343
      %405 = vmatmul.f32.gmra.mxu0 %v375
      %v406 = vpop.f32.mrf.mxu0
      %v407 = vadd.f32 0.0, %v406
      %408 = vmatmul.f32.gmra.mxu0 %v376
      %v409 = vpop.f32.mrf.mxu0
      %v410 = vadd.f32 0.0, %v409
      %411 = vmatmul.f32.gmra.mxu0 %v377
      %v412 = vpop.f32.mrf.mxu0
      %v413 = vadd.f32 0.0, %v412
      %414 = vmatmul.f32.gmra.mxu0 %v378
      %v415 = vpop.f32.mrf.mxu0
      %v416 = vadd.f32 0.0, %v415
      %417 = vmatmul.f32.gmra.mxu0 %v379
      %v418 = vpop.f32.mrf.mxu0
      %v419 = vadd.f32 0.0, %v418
      %420 = vmatmul.f32.gmra.mxu0 %v380
      %v421 = vpop.f32.mrf.mxu0
      %v422 = vadd.f32 0.0, %v421
      %423 = vmatmul.f32.gmra.mxu0 %v381
      %v424 = vpop.f32.mrf.mxu0
      %v425 = vadd.f32 0.0, %v424
      %426 = vmatmul.f32.gmra.mxu0 %v382
      %v427 = vpop.f32.mrf.mxu0
      %v428 = vadd.f32 0.0, %v427
      %429 = vmatmul.f32.gmra.mxu0 %v383
      %v430 = vpop.f32.mrf.mxu0
      %v431 = vadd.f32 0.0, %v430
      %432 = vmatmul.f32.gmra.mxu0 %v384
      %v433 = vpop.f32.mrf.mxu0
      %v434 = vadd.f32 0.0, %v433
      %435 = vmatmul.f32.gmra.mxu0 %v385
      %v436 = vpop.f32.mrf.mxu0
      %v437 = vadd.f32 0.0, %v436
      %438 = vmatmul.f32.gmra.mxu0 %v386
      %v439 = vpop.f32.mrf.mxu0
      %v440 = vadd.f32 0.0, %v439
      %441 = vmatmul.f32.gmra.mxu0 %v387
      %v442 = vpop.f32.mrf.mxu0
      %v443 = vadd.f32 0.0, %v442
      %444 = vmatmul.f32.gmra.mxu0 %v388
      %v445 = vpop.f32.mrf.mxu0
      %v446 = vadd.f32 0.0, %v445
      %447 = vdwg.mxu0
      %v448 = vadd.f32 %v407, 1.0
      %v449 = vadd.f32 %v410, 1.0
      %v450 = vadd.f32 %v413, 1.0
      %v451 = vadd.f32 %v416, 1.0
      %v452 = vadd.f32 %v419, 1.0
      %v453 = vadd.f32 %v422, 1.0
      %v454 = vadd.f32 %v425, 1.0
      %v455 = vadd.f32 %v428, 1.0
      %v456 = vadd.f32 %v431, 1.0
      %v457 = vadd.f32 %v434, 1.0
      %v458 = vadd.f32 %v437, 1.0
      %v459 = vadd.f32 %v440, 1.0
      %v460 = vadd.f32 %v443, 1.0
      %v461 = vadd.f32 %v446, 1.0
      %v462 = vrcp.pop %v448
      %v463 = vrcp.pop %v449
      %v464 = vrcp.pop %v450
      %v465 = vrcp.pop %v451
      %v466 = vrcp.pop %v452
      %v467 = vrcp.pop %v453
      %v468 = vrcp.pop %v454
      %v469 = vrcp.pop %v455
      %v470 = vrcp.pop %v456
      %v471 = vrcp.pop %v457
      %v472 = vrcp.pop %v458
      %v473 = vrcp.pop %v459
      %v474 = vrcp.pop %v460
      %v475 = vrcp.pop %v461
      %v476 = vmul.f32 %v407, %v462
      %v477 = vmul.f32 %v410, %v463
      %v478 = vmul.f32 %v413, %v464
      %v479 = vmul.f32 %v416, %v465
      %v480 = vmul.f32 %v419, %v466
      %v481 = vmul.f32 %v422, %v467
      %v482 = vmul.f32 %v425, %v468
      %v483 = vmul.f32 %v428, %v469
      %v484 = vmul.f32 %v431, %v470
      %v485 = vmul.f32 %v434, %v471
      %v486 = vmul.f32 %v437, %v472
      %v487 = vmul.f32 %v440, %v473
      %v488 = vmul.f32 %v443, %v474
      %v489 = vmul.f32 %v446, %v475
      %v490 = vadd.f32 %v407, 1e-12
      %v491 = vadd.f32 %v410, 1e-12
      %v492 = vadd.f32 %v413, 1e-12
      %v493 = vadd.f32 %v416, 1e-12
      %v494 = vadd.f32 %v419, 1e-12
      %v495 = vadd.f32 %v422, 1e-12
      %v496 = vadd.f32 %v425, 1e-12
      %v497 = vadd.f32 %v428, 1e-12
      %v498 = vadd.f32 %v431, 1e-12
      %v499 = vadd.f32 %v434, 1e-12
      %v500 = vadd.f32 %v437, 1e-12
      %v501 = vadd.f32 %v440, 1e-12
      %v502 = vadd.f32 %v443, 1e-12
      %v503 = vadd.f32 %v446, 1e-12
      %v504 = vrsqrt.pop %v490
      %v505 = vmul.f32 %v504, %v490
      %v506 = vmul.f32 %v505, %v504
      %v507 = vmul.f32 0.5, %v506
      %v508 = vsub.f32 1.5, %v507
      %v509 = vmul.f32 %v504, %v508
      %vm510 = vweird.f32 %v490
      %vm511 = vweird.f32 %v504
      %vm512 = vmor %vm510, %vm511
      %v513 = vsel %vm512, %v504, %v509
      %v514 = vrsqrt.pop %v491
      %v515 = vmul.f32 %v514, %v491
      %v516 = vmul.f32 %v515, %v514
      %v517 = vmul.f32 0.5, %v516
      %v518 = vsub.f32 1.5, %v517
      %v519 = vmul.f32 %v514, %v518
      %vm520 = vweird.f32 %v491
      %vm521 = vweird.f32 %v514
      %vm522 = vmor %vm520, %vm521
      %v523 = vsel %vm522, %v514, %v519
      %v524 = vrsqrt.pop %v492
      %v525 = vmul.f32 %v524, %v492
      %v526 = vmul.f32 %v525, %v524
      %v527 = vmul.f32 0.5, %v526
      %v528 = vsub.f32 1.5, %v527
      %v529 = vmul.f32 %v524, %v528
      %vm530 = vweird.f32 %v492
      %vm531 = vweird.f32 %v524
      %vm532 = vmor %vm530, %vm531
      %v533 = vsel %vm532, %v524, %v529
      %v534 = vrsqrt.pop %v493
      %v535 = vmul.f32 %v534, %v493
      %v536 = vmul.f32 %v535, %v534
      %v537 = vmul.f32 0.5, %v536
      %v538 = vsub.f32 1.5, %v537
      %v539 = vmul.f32 %v534, %v538
      %vm540 = vweird.f32 %v493
      %vm541 = vweird.f32 %v534
      %vm542 = vmor %vm540, %vm541
      %v543 = vsel %vm542, %v534, %v539
      %v544 = vrsqrt.pop %v494
      %v545 = vmul.f32 %v544, %v494
      %v546 = vmul.f32 %v545, %v544
      %v547 = vmul.f32 0.5, %v546
      %v548 = vsub.f32 1.5, %v547
      %v549 = vmul.f32 %v544, %v548
      %vm550 = vweird.f32 %v494
      %vm551 = vweird.f32 %v544
      %vm552 = vmor %vm550, %vm551
      %v553 = vsel %vm552, %v544, %v549
      %v554 = vrsqrt.pop %v495
      %v555 = vmul.f32 %v554, %v495
      %v556 = vmul.f32 %v555, %v554
      %v557 = vmul.f32 0.5, %v556
      %v558 = vsub.f32 1.5, %v557
      %v559 = vmul.f32 %v554, %v558
      %vm560 = vweird.f32 %v495
      %vm561 = vweird.f32 %v554
      %vm562 = vmor %vm560, %vm561
      %v563 = vsel %vm562, %v554, %v559
      %v564 = vrsqrt.pop %v496
      %v565 = vmul.f32 %v564, %v496
      %v566 = vmul.f32 %v565, %v564
      %v567 = vmul.f32 0.5, %v566
      %v568 = vsub.f32 1.5, %v567
      %v569 = vmul.f32 %v564, %v568
      %vm570 = vweird.f32 %v496
      %vm571 = vweird.f32 %v564
      %vm572 = vmor %vm570, %vm571
      %v573 = vsel %vm572, %v564, %v569
      %v574 = vrsqrt.pop %v497
      %v575 = vmul.f32 %v574, %v497
      %v576 = vmul.f32 %v575, %v574
      %v577 = vmul.f32 0.5, %v576
      %v578 = vsub.f32 1.5, %v577
      %v579 = vmul.f32 %v574, %v578
      %vm580 = vweird.f32 %v497
      %vm581 = vweird.f32 %v574
      %vm582 = vmor %vm580, %vm581
      %v583 = vsel %vm582, %v574, %v579
      %v584 = vrsqrt.pop %v498
      %v585 = vmul.f32 %v584, %v498
      %v586 = vmul.f32 %v585, %v584
      %v587 = vmul.f32 0.5, %v586
      %v588 = vsub.f32 1.5, %v587
      %v589 = vmul.f32 %v584, %v588
      %vm590 = vweird.f32 %v498
      %vm591 = vweird.f32 %v584
      %vm592 = vmor %vm590, %vm591
      %v593 = vsel %vm592, %v584, %v589
      %v594 = vrsqrt.pop %v499
      %v595 = vmul.f32 %v594, %v499
      %v596 = vmul.f32 %v595, %v594
      %v597 = vmul.f32 0.5, %v596
      %v598 = vsub.f32 1.5, %v597
      %v599 = vmul.f32 %v594, %v598
      %vm600 = vweird.f32 %v499
      %vm601 = vweird.f32 %v594
      %vm602 = vmor %vm600, %vm601
      %v603 = vsel %vm602, %v594, %v599
      %v604 = vrsqrt.pop %v500
      %v605 = vmul.f32 %v604, %v500
      %v606 = vmul.f32 %v605, %v604
      %v607 = vmul.f32 0.5, %v606
      %v608 = vsub.f32 1.5, %v607
      %v609 = vmul.f32 %v604, %v608
      %vm610 = vweird.f32 %v500
      %vm611 = vweird.f32 %v604
      %vm612 = vmor %vm610, %vm611
      %v613 = vsel %vm612, %v604, %v609
      %v614 = vrsqrt.pop %v501
      %v615 = vmul.f32 %v614, %v501
      %v616 = vmul.f32 %v615, %v614
      %v617 = vmul.f32 0.5, %v616
      %v618 = vsub.f32 1.5, %v617
      %v619 = vmul.f32 %v614, %v618
      %vm620 = vweird.f32 %v501
      %vm621 = vweird.f32 %v614
      %vm622 = vmor %vm620, %vm621
      %v623 = vsel %vm622, %v614, %v619
      %v624 = vrsqrt.pop %v502
      %v625 = vmul.f32 %v624, %v502
      %v626 = vmul.f32 %v625, %v624
      %v627 = vmul.f32 0.5, %v626
      %v628 = vsub.f32 1.5, %v627
      %v629 = vmul.f32 %v624, %v628
      %vm630 = vweird.f32 %v502
      %vm631 = vweird.f32 %v624
      %vm632 = vmor %vm630, %vm631
      %v633 = vsel %vm632, %v624, %v629
      %v634 = vrsqrt.pop %v503
      %v635 = vmul.f32 %v634, %v503
      %v636 = vmul.f32 %v635, %v634
      %v637 = vmul.f32 0.5, %v636
      %v638 = vsub.f32 1.5, %v637
      %v639 = vmul.f32 %v634, %v638
      %vm640 = vweird.f32 %v503
      %vm641 = vweird.f32 %v634
      %vm642 = vmor %vm640, %vm641
      %v643 = vsel %vm642, %v634, %v639
      %v644 = vmul.f32 %v476, %v513
      %v645 = vmul.f32 %v477, %v523
      %v646 = vmul.f32 %v478, %v533
      %v647 = vmul.f32 %v479, %v543
      %v648 = vmul.f32 %v480, %v553
      %v649 = vmul.f32 %v481, %v563
      %v650 = vmul.f32 %v482, %v573
      %v651 = vmul.f32 %v483, %v583
      %v652 = vmul.f32 %v484, %v593
      %v653 = vmul.f32 %v485, %v603
      %v654 = vmul.f32 %v486, %v613
      %v655 = vmul.f32 %v487, %v623
      %v656 = vmul.f32 %v488, %v633
      %v657 = vmul.f32 %v489, %v643
      %658 = vmatpush.msra.mxu0 %v374
      %659 = vmatpush.msra.mxu0 %v373
      %660 = vmatpush.msra.mxu0 %v372
      %661 = vmatpush.msra.mxu0 %v371
      %662 = vmatpush.msra.mxu0 %v370
      %663 = vmatpush.msra.mxu0 %v369
      %664 = vmatpush.msra.mxu0 %v368
      %665 = vmatpush.msra.mxu0 %v367
      %666 = vmatpush.msra.mxu0 %v366
      %667 = vmatpush.msra.mxu0 %v365
      %668 = vmatpush.msra.mxu0 %v364
      %669 = vmatpush.msra.mxu0 %v363
      %670 = vmatpush.msra.mxu0 %v362
      %671 = vmatpush.msra.mxu0 %v361
      %672 = vmatpush.msra.mxu0 %v360
      %673 = vmatpush.msra.mxu0 %v359
      %674 = vmatmul.f32.gmra.mxu0 %v644
      %v675 = vpop.f32.mrf.mxu0
      %v676 = vadd.f32 0.0, %v675
      %677 = vmatmul.f32.gmra.mxu0 %v645
      %v678 = vpop.f32.mrf.mxu0
      %v679 = vadd.f32 0.0, %v678
      %680 = vmatmul.f32.gmra.mxu0 %v646
      %v681 = vpop.f32.mrf.mxu0
      %v682 = vadd.f32 0.0, %v681
      %683 = vmatmul.f32.gmra.mxu0 %v647
      %v684 = vpop.f32.mrf.mxu0
      %v685 = vadd.f32 0.0, %v684
      %686 = vmatmul.f32.gmra.mxu0 %v648
      %v687 = vpop.f32.mrf.mxu0
      %v688 = vadd.f32 0.0, %v687
      %689 = vmatmul.f32.gmra.mxu0 %v649
      %v690 = vpop.f32.mrf.mxu0
      %v691 = vadd.f32 0.0, %v690
      %692 = vmatmul.f32.gmra.mxu0 %v650
      %v693 = vpop.f32.mrf.mxu0
      %v694 = vadd.f32 0.0, %v693
      %695 = vmatmul.f32.gmra.mxu0 %v651
      %v696 = vpop.f32.mrf.mxu0
      %v697 = vadd.f32 0.0, %v696
      %698 = vmatmul.f32.gmra.mxu0 %v652
      %v699 = vpop.f32.mrf.mxu0
      %v700 = vadd.f32 0.0, %v699
      %701 = vmatmul.f32.gmra.mxu0 %v653
      %v702 = vpop.f32.mrf.mxu0
      %v703 = vadd.f32 0.0, %v702
      %704 = vmatmul.f32.gmra.mxu0 %v654
      %v705 = vpop.f32.mrf.mxu0
      %v706 = vadd.f32 0.0, %v705
      %707 = vmatmul.f32.gmra.mxu0 %v655
      %v708 = vpop.f32.mrf.mxu0
      %v709 = vadd.f32 0.0, %v708
      %710 = vmatmul.f32.gmra.mxu0 %v656
      %v711 = vpop.f32.mrf.mxu0
      %v712 = vadd.f32 0.0, %v711
      %713 = vmatmul.f32.gmra.mxu0 %v657
      %v714 = vpop.f32.mrf.mxu0
      %v715 = vadd.f32 0.0, %v714
      %716 = vdwg.mxu0
      %v717 = vmul.f32 %v476, 1e-09
      %v718 = vmul.f32 %v477, 1e-09
      %v719 = vmul.f32 %v478, 1e-09
      %v720 = vmul.f32 %v479, 1e-09
      %v721 = vmul.f32 %v480, 1e-09
      %v722 = vmul.f32 %v481, 1e-09
      %v723 = vmul.f32 %v482, 1e-09
      %v724 = vmul.f32 %v483, 1e-09
      %v725 = vmul.f32 %v484, 1e-09
      %v726 = vmul.f32 %v485, 1e-09
      %v727 = vmul.f32 %v486, 1e-09
      %v728 = vmul.f32 %v487, 1e-09
      %v729 = vmul.f32 %v488, 1e-09
      %v730 = vmul.f32 %v489, 1e-09
      %731 = vmatpush.msra.mxu0 %v374
      %732 = vmatpush.msra.mxu0 %v373
      %733 = vmatpush.msra.mxu0 %v372
      %734 = vmatpush.msra.mxu0 %v371
      %735 = vmatpush.msra.mxu0 %v370
      %736 = vmatpush.msra.mxu0 %v369
      %737 = vmatpush.msra.mxu0 %v368
      %738 = vmatpush.msra.mxu0 %v367
      %739 = vmatpush.msra.mxu0 %v366
      %740 = vmatpush.msra.mxu0 %v365
      %741 = vmatpush.msra.mxu0 %v364
      %742 = vmatpush.msra.mxu0 %v363
      %743 = vmatpush.msra.mxu0 %v362
      %744 = vmatpush.msra.mxu0 %v361
      %745 = vmatpush.msra.mxu0 %v360
      %746 = vmatpush.msra.mxu0 %v359
      %747 = vmatmul.f32.gmra.mxu0 %v717
      %v748 = vpop.f32.mrf.mxu0
      %v749 = vadd.f32 0.0, %v748
      %750 = vmatmul.f32.gmra.mxu0 %v718
      %v751 = vpop.f32.mrf.mxu0
      %v752 = vadd.f32 0.0, %v751
      %753 = vmatmul.f32.gmra.mxu0 %v719
      %v754 = vpop.f32.mrf.mxu0
      %v755 = vadd.f32 0.0, %v754
      %756 = vmatmul.f32.gmra.mxu0 %v720
      %v757 = vpop.f32.mrf.mxu0
      %v758 = vadd.f32 0.0, %v757
      %759 = vmatmul.f32.gmra.mxu0 %v721
      %v760 = vpop.f32.mrf.mxu0
      %v761 = vadd.f32 0.0, %v760
      %762 = vmatmul.f32.gmra.mxu0 %v722
      %v763 = vpop.f32.mrf.mxu0
      %v764 = vadd.f32 0.0, %v763
      %765 = vmatmul.f32.gmra.mxu0 %v723
      %v766 = vpop.f32.mrf.mxu0
      %v767 = vadd.f32 0.0, %v766
      %768 = vmatmul.f32.gmra.mxu0 %v724
      %v769 = vpop.f32.mrf.mxu0
      %v770 = vadd.f32 0.0, %v769
      %771 = vmatmul.f32.gmra.mxu0 %v725
      %v772 = vpop.f32.mrf.mxu0
      %v773 = vadd.f32 0.0, %v772
      %774 = vmatmul.f32.gmra.mxu0 %v726
      %v775 = vpop.f32.mrf.mxu0
      %v776 = vadd.f32 0.0, %v775
      %777 = vmatmul.f32.gmra.mxu0 %v727
      %v778 = vpop.f32.mrf.mxu0
      %v779 = vadd.f32 0.0, %v778
      %780 = vmatmul.f32.gmra.mxu0 %v728
      %v781 = vpop.f32.mrf.mxu0
      %v782 = vadd.f32 0.0, %v781
      %783 = vmatmul.f32.gmra.mxu0 %v729
      %v784 = vpop.f32.mrf.mxu0
      %v785 = vadd.f32 0.0, %v784
      %786 = vmatmul.f32.gmra.mxu0 %v730
      %v787 = vpop.f32.mrf.mxu0
      %v788 = vadd.f32 0.0, %v787
      %789 = vdwg.mxu0
      %v790 = vmul.f32 %v329, %v676
      %v791 = vmul.f32 %v330, %v679
      %v792 = vmul.f32 %v331, %v682
      %v793 = vmul.f32 %v332, %v685
      %v794 = vmul.f32 %v333, %v688
      %v795 = vmul.f32 %v334, %v691
      %v796 = vmul.f32 %v335, %v694
      %v797 = vmul.f32 %v336, %v697
      %v798 = vmul.f32 %v337, %v700
      %v799 = vmul.f32 %v338, %v703
      %v800 = vmul.f32 %v339, %v706
      %v801 = vmul.f32 %v340, %v709
      %v802 = vmul.f32 %v341, %v712
      %v803 = vmul.f32 %v342, %v715
      %v804 = vadd.f32 %v790, %v749
      %v805 = vadd.f32 %v791, %v752
      %v806 = vadd.f32 %v792, %v755
      %v807 = vadd.f32 %v793, %v758
      %v808 = vadd.f32 %v794, %v761
      %v809 = vadd.f32 %v795, %v764
      %v810 = vadd.f32 %v796, %v767
      %v811 = vadd.f32 %v797, %v770
      %v812 = vadd.f32 %v798, %v773
      %v813 = vadd.f32 %v799, %v776
      %v814 = vadd.f32 %v800, %v779
      %v815 = vadd.f32 %v801, %v782
      %v816 = vadd.f32 %v802, %v785
      %v817 = vadd.f32 %v803, %v788
      %818 = vst [vmem:[#allocation11] sm:$0xff] %v804
      %819 = vst [vmem:[#allocation11 + $0x8] sm:$0xff] %v805
      %820 = vst [vmem:[#allocation11 + $0x10] sm:$0xff] %v806
      %821 = vst [vmem:[#allocation11 + $0x18] sm:$0xff] %v807
      %822 = vst [vmem:[#allocation11 + $0x20] sm:$0xff] %v808
      %823 = vst [vmem:[#allocation11 + $0x28] sm:$0xff] %v809
      %824 = vst [vmem:[#allocation11 + $0x30] sm:$0xff] %v810
      %825 = vst [vmem:[#allocation11 + $0x38] sm:$0xff] %v811
      %826 = vst [vmem:[#allocation11 + $0x40] sm:$0xff] %v812
      %827 = vst [vmem:[#allocation11 + $0x48] sm:$0xff] %v813
      %828 = vst [vmem:[#allocation11 + $0x50] sm:$0xff] %v814
      %829 = vst [vmem:[#allocation11 + $0x58] sm:$0xff] %v815
      %830 = vst [vmem:[#allocation11 + $0x60] sm:$0xff] %v816
      %831 = vst [vmem:[#allocation11 + $0x68] sm:$0xff] %v817
    $region45: #{tpu_custom_call.1} parent=1 // pred_fallthru
      _
    // Predicated region
    $region46: #{tpu_custom_call.1} parent=1 // pred_check
      _
    $region47: #{tpu_custom_call.1} parent=1 // pred_check_branch
      %833 = sbr.rel (0) target = $region49
    $region48: #{tpu_custom_call.1} parent=1 // pred_region
      %835 = vsyncadd [#allocation5], 0
      %s836 = sshll.u32 [#allocation11], 4
      %s837 = int_to_ptr.vmem [resolvable:$true] %s836
      %s838 = sshll.u32 %s5, 4
      %s839 = int_to_ptr.hbm [resolvable:$true] %s838
      %844 = dma.vmem_to_hbm [thread:$0]  %s837, 1792, %s839, [#allocation5], 128, 128, 8
    $region49: #{tpu_custom_call.1} parent=1 // pred_fallthru
      _
    // Predicated region
    $region50: #{tpu_custom_call.1} parent=1 // pred_check
      _
    $region51: #{tpu_custom_call.1} parent=1 // pred_check_branch
      %846 = sbr.rel (0) target = $region53
    $region52: #{tpu_custom_call.1} parent=1 // pred_region
      %848 = dma.done [#allocation5], 1792
    $region53: #{tpu_custom_call.1} parent=1 // pred_fallthru
      _
    %849 = vsyncpa [#allocation4], 1
    %850 = vsyncpa [#allocation7], 1
    %851 = vsyncpa [#allocation10], 1
    %852 = vsyncpa [#allocation5], 1

// kernel: tpu_custom_call.1
$region0: #{tpu_custom_call.1}
  #allocation0 [shape = 'u32[]', space=smem, size = 0x4, offset = 0x4, fixed_abs, tag = 'smem constant byte address 0x4 - core index']
  #allocation1 [shape = 'u32[72,128]{1,0:T(1,128)}', space=vmem, size = 0x9000, scoped, tag = 'internal scratch']
  #allocation2 [shape = 'f32[112,128]{1,0:T(8,128)}', space=vmem, size = 0xe000, scoped, tag = 'scratch operand']
  %s0 = inlined_call_operand.hbm [shape: bf16[112,128], index: 0, kind: input, shape index: {}]
  %s1 = inlined_call_operand.hbm [shape: bf16[128,128], index: 1, kind: input, shape index: {}]
  %s2 = inlined_call_operand.vmem [shape: f32[1,128], index: 2, kind: input, shape index: {}]
  %s3 = inlined_call_operand.hbm [shape: f32[128,128], index: 3, kind: input, shape index: {}]
  %s4 = inlined_call_operand.hbm [shape: f32[128,128], index: 4, kind: input, shape index: {}]
  %s5 = inlined_call_operand.hbm [shape: f32[112,128], index: 5, kind: output, shape index: {}]
  %s6 = sld [smem:[#allocation0]]
  $region54: #{tpu_custom_call.1} parent=0
    _
  %s8 = ssub.s32 1, %s6
  %s9 = scalar_select 0, %s8, %s6
  $region1: #{tpu_custom_call.1} parent=0
    #allocation3 [shape = 'u8[28672]{0}', space=vmem, size = 0x7000, scoped, tag = 'input window, operand 0, single buffered']
    #allocation4 [shape = 's32[1]{0}', space=sflag, size = 0x4, scoped, tag = 'scoped memory for tpu_custom_call.1']
    #allocation5 [shape = 's32[1]{0}', space=sflag, size = 0x4, scoped, tag = 'scoped memory for tpu_custom_call.1']
    #allocation6 [shape = 'u8[32768]{0}', space=vmem, size = 0x8000, scoped, tag = 'input window, operand 1, single buffered']
    #allocation7 [shape = 's32[1]{0}', space=sflag, size = 0x4, scoped, tag = 'scoped memory for tpu_custom_call.1']
    #allocation8 [shape = 'u8[65536]{0}', space=vmem, size = 0x10000, scoped, tag = 'input window, operand 3, single buffered']
    #allocation9 [shape = 'u8[65536]{0}', space=vmem, size = 0x10000, scoped, tag = 'input window, operand 4, single buffered']
    #allocation10 [shape = 's32[1]{0}', space=sflag, size = 0x4, scoped, tag = 'scoped memory for tpu_custom_call.1']
    #allocation11 [shape = 'u8[57344]{0}', space=vmem, size = 0xe000, scoped, tag = 'output window, operand 0, single buffered']
    %10 = vsyncpa [#allocation4], 0
    %11 = vsyncpa [#allocation7], 0
    %12 = vsyncpa [#allocation10], 0
    %13 = vsyncpa [#allocation5], 0
    // Predicated region
    $region2: #{tpu_custom_call.1} parent=1 // pred_check
      _
    $region3: #{tpu_custom_call.1} parent=1 // pred_check_branch
      %15 = sbr.rel (0) target = $region5
    $region4: #{tpu_custom_call.1} parent=1 // pred_region
      %17 = vsyncadd [#allocation4], 0
      %s18 = sshll.u32 %s0, 4
      %s19 = int_to_ptr.hbm [resolvable:$true] %s18
      %s20 = sshll.u32 [#allocation3], 4
      %s21 = int_to_ptr.vmem [resolvable:$true] %s20
      %26 = dma.hbm_to_vmem [thread:$0]  %s19, 896, %s21, [#allocation4], 64, 64, 4
    $region5: #{tpu_custom_call.1} parent=1 // pred_fallthru
      _
    // Predicated region
    $region6: #{tpu_custom_call.1} parent=1 // pred_check
      _
    $region7: #{tpu_custom_call.1} parent=1 // pred_check_branch
      %28 = sbr.rel (0) target = $region9
    $region8: #{tpu_custom_call.1} parent=1 // pred_region
      %30 = vsyncadd [#allocation7], 0
      %s31 = sshll.u32 %s1, 4
      %s32 = int_to_ptr.hbm [resolvable:$true] %s31
      %s33 = sshll.u32 [#allocation6], 4
      %s34 = int_to_ptr.vmem [resolvable:$true] %s33
      %39 = dma.hbm_to_vmem [thread:$0]  %s32, 1024, %s34, [#allocation7], 64, 64, 4
    $region9: #{tpu_custom_call.1} parent=1 // pred_fallthru
      _
    // Predicated region
    $region10: #{tpu_custom_call.1} parent=1 // pred_check
      _
    $region11: #{tpu_custom_call.1} parent=1 // pred_check_branch
      %41 = sbr.rel (0) target = $region13
    $region12: #{tpu_custom_call.1} parent=1 // pred_region
      _
    $region13: #{tpu_custom_call.1} parent=1 // pred_fallthru
      _
    // Predicated region
    $region14: #{tpu_custom_call.1} parent=1 // pred_check
      _
    $region15: #{tpu_custom_call.1} parent=1 // pred_check_branch
      %43 = sbr.rel (0) target = $region17
    $region16: #{tpu_custom_call.1} parent=1 // pred_region
      %45 = vsyncadd [#allocation7], 0
      %s46 = sshll.u32 %s3, 4
      %s47 = int_to_ptr.hbm [resolvable:$true] %s46
      %s48 = sshll.u32 [#allocation8], 4
      %s49 = int_to_ptr.vmem [resolvable:$true] %s48
      %54 = dma.hbm_to_vmem [thread:$0]  %s47, 2048, %s49, [#allocation7], 128, 128, 8
    $region17: #{tpu_custom_call.1} parent=1 // pred_fallthru
      _
    // Predicated region
    $region18: #{tpu_custom_call.1} parent=1 // pred_check
      _
    $region19: #{tpu_custom_call.1} parent=1 // pred_check_branch
      %56 = sbr.rel (0) target = $region21
    $region20: #{tpu_custom_call.1} parent=1 // pred_region
      %58 = vsyncadd [#allocation10], 0
      %s59 = sshll.u32 %s4, 4
      %s60 = int_to_ptr.hbm [resolvable:$true] %s59
      %s61 = sshll.u32 [#allocation9], 4
      %s62 = int_to_ptr.vmem [resolvable:$true] %s61
      %67 = dma.hbm_to_vmem [thread:$0]  %s60, 2048, %s62, [#allocation10], 128, 128, 8
    $region21: #{tpu_custom_call.1} parent=1 // pred_fallthru
      _
    // Predicated region
    $region22: #{tpu_custom_call.1} parent=1 // pred_check
      _
    $region23: #{tpu_custom_call.1} parent=1 // pred_check_branch
      %69 = sbr.rel (0) target = $region25
    $region24: #{tpu_custom_call.1} parent=1 // pred_region
      %71 = dma.done [#allocation4], 896
    $region25: #{tpu_custom_call.1} parent=1 // pred_fallthru
      _
    // Predicated region
    $region26: #{tpu_custom_call.1} parent=1 // pred_check
      _
    $region27: #{tpu_custom_call.1} parent=1 // pred_check_branch
      %73 = sbr.rel (0) target = $region29
    $region28: #{tpu_custom_call.1} parent=1 // pred_region
      %75 = dma.done [#allocation7], 1024
    $region29: #{tpu_custom_call.1} parent=1 // pred_fallthru
      _
    // Predicated region
    $region30: #{tpu_custom_call.1} parent=1 // pred_check
      _
    $region31: #{tpu_custom_call.1} parent=1 // pred_check_branch
      %77 = sbr.rel (0) target = $region33
    $region32: #{tpu_custom_call.1} parent=1 // pred_region
      %79 = dma.done [#allocation7], 2048
    $region33: #{tpu_custom_call.1} parent=1 // pred_fallthru
      _
    // Predicated region
    $region34: #{tpu_custom_call.1} parent=1 // pred_check
      _
    $region35: #{tpu_custom_call.1} parent=1 // pred_check_branch
      %81 = sbr.rel (0) target = $region37
    $region36: #{tpu_custom_call.1} parent=1 // pred_region
      %83 = dma.done [#allocation10], 2048
    $region37: #{tpu_custom_call.1} parent=1 // pred_fallthru
      _
    %p84 = scmp.eq.s32.totalorder 0, 0
    // Predicated region
    $region38: #{tpu_custom_call.1} parent=1 // pred_check
      %p85 = pneg %p84
    $region39: #{tpu_custom_call.1} parent=1 // pred_check_branch
      %87 = sbr.rel (%p85) target = $region41
    $region40: #{tpu_custom_call.1} parent=1 // pred_region
      %88 = vst [vmem:[#allocation2] sm:$0xff] 0.0
      %89 = vst [vmem:[#allocation2 + $0x8] sm:$0xff] 0.0
      %90 = vst [vmem:[#allocation2 + $0x10] sm:$0xff] 0.0
      %91 = vst [vmem:[#allocation2 + $0x18] sm:$0xff] 0.0
      %92 = vst [vmem:[#allocation2 + $0x20] sm:$0xff] 0.0
      %93 = vst [vmem:[#allocation2 + $0x28] sm:$0xff] 0.0
      %94 = vst [vmem:[#allocation2 + $0x30] sm:$0xff] 0.0
      %95 = vst [vmem:[#allocation2 + $0x38] sm:$0xff] 0.0
      %96 = vst [vmem:[#allocation2 + $0x40] sm:$0xff] 0.0
      %97 = vst [vmem:[#allocation2 + $0x48] sm:$0xff] 0.0
      %98 = vst [vmem:[#allocation2 + $0x50] sm:$0xff] 0.0
      %99 = vst [vmem:[#allocation2 + $0x58] sm:$0xff] 0.0
      %100 = vst [vmem:[#allocation2 + $0x60] sm:$0xff] 0.0
      %101 = vst [vmem:[#allocation2 + $0x68] sm:$0xff] 0.0
    $region41: #{tpu_custom_call.1} parent=1 // pred_fallthru
      _
    %v102 = vld [vmem:[#allocation2] sm:$0xff]
    %v103 = vld [vmem:[#allocation2 + $0x8] sm:$0xff]
    %v104 = vld [vmem:[#allocation2 + $0x10] sm:$0xff]
    %v105 = vld [vmem:[#allocation2 + $0x18] sm:$0xff]
    %v106 = vld [vmem:[#allocation2 + $0x20] sm:$0xff]
    %v107 = vld [vmem:[#allocation2 + $0x28] sm:$0xff]
    %v108 = vld [vmem:[#allocation2 + $0x30] sm:$0xff]
    %v109 = vld [vmem:[#allocation2 + $0x38] sm:$0xff]
    %v110 = vld [vmem:[#allocation2 + $0x40] sm:$0xff]
    %v111 = vld [vmem:[#allocation2 + $0x48] sm:$0xff]
    %v112 = vld [vmem:[#allocation2 + $0x50] sm:$0xff]
    %v113 = vld [vmem:[#allocation2 + $0x58] sm:$0xff]
    %v114 = vld [vmem:[#allocation2 + $0x60] sm:$0xff]
    %v115 = vld [vmem:[#allocation2 + $0x68] sm:$0xff]
    %v116 = vld [vmem:[#allocation3] sm:$0xf]
    %v117 = vld [vmem:[#allocation3 + $0x4] sm:$0xf]
    %v118 = vld [vmem:[#allocation3 + $0x8] sm:$0xf]
    %v119 = vld [vmem:[#allocation3 + $0xc] sm:$0xf]
    %v120 = vld [vmem:[#allocation3 + $0x10] sm:$0xf]
    %v121 = vld [vmem:[#allocation3 + $0x14] sm:$0xf]
    %v122 = vld [vmem:[#allocation3 + $0x18] sm:$0xf]
    %v123 = vld [vmem:[#allocation3 + $0x1c] sm:$0xf]
    %v124 = vld [vmem:[#allocation3 + $0x20] sm:$0xf]
    %v125 = vld [vmem:[#allocation3 + $0x24] sm:$0xf]
    %v126 = vld [vmem:[#allocation3 + $0x28] sm:$0xf]
    %v127 = vld [vmem:[#allocation3 + $0x2c] sm:$0xf]
    %v128 = vld [vmem:[#allocation3 + $0x30] sm:$0xf]
    %v129 = vld [vmem:[#allocation3 + $0x34] sm:$0xf]
    %v130 = vld [vmem:[#allocation6] sm:$0xf]
    %v131 = vld [vmem:[#allocation6 + $0x4] sm:$0xf]
    %v132 = vld [vmem:[#allocation6 + $0x8] sm:$0xf]
    %v133 = vld [vmem:[#allocation6 + $0xc] sm:$0xf]
    %v134 = vld [vmem:[#allocation6 + $0x10] sm:$0xf]
    %v135 = vld [vmem:[#allocation6 + $0x14] sm:$0xf]
    %v136 = vld [vmem:[#allocation6 + $0x18] sm:$0xf]
    %v137 = vld [vmem:[#allocation6 + $0x1c] sm:$0xf]
    %v138 = vld [vmem:[#allocation6 + $0x20] sm:$0xf]
    %v139 = vld [vmem:[#allocation6 + $0x24] sm:$0xf]
    %v140 = vld [vmem:[#allocation6 + $0x28] sm:$0xf]
    %v141 = vld [vmem:[#allocation6 + $0x2c] sm:$0xf]
    %v142 = vld [vmem:[#allocation6 + $0x30] sm:$0xf]
    %v143 = vld [vmem:[#allocation6 + $0x34] sm:$0xf]
    %v144 = vld [vmem:[#allocation6 + $0x38] sm:$0xf]
    %v145 = vld [vmem:[#allocation6 + $0x3c] sm:$0xf]
    %v160 = vunpack.c.l.b16 %v116
    %v161 = vunpack.c.l.b16 %v117
    %v162 = vunpack.c.l.b16 %v118
    %v163 = vunpack.c.l.b16 %v119
    %v164 = vunpack.c.l.b16 %v120
    %v165 = vunpack.c.l.b16 %v121
    %v166 = vunpack.c.l.b16 %v122
    %v167 = vunpack.c.l.b16 %v123
    %v168 = vunpack.c.l.b16 %v124
    %v169 = vunpack.c.l.b16 %v125
    %v170 = vunpack.c.l.b16 %v126
    %v171 = vunpack.c.l.b16 %v127
    %v172 = vunpack.c.l.b16 %v128
    %v173 = vunpack.c.l.b16 %v129
    %v174 = vpack.c.b16 %v161, %v160
    %v175 = vpack.c.b16 %v163, %v162
    %v176 = vpack.c.b16 %v165, %v164
    %v177 = vpack.c.b16 %v167, %v166
    %v178 = vpack.c.b16 %v169, %v168
    %v179 = vpack.c.b16 %v171, %v170
    %v180 = vpack.c.b16 %v173, %v172
    %v204 = vunpack.c.l.b16 %v130
    %v205 = vunpack.c.l.b16 %v131
    %v206 = vunpack.c.l.b16 %v132
    %v207 = vunpack.c.l.b16 %v133
    %v208 = vunpack.c.l.b16 %v134
    %v209 = vunpack.c.l.b16 %v135
    %v210 = vunpack.c.l.b16 %v136
    %v211 = vunpack.c.l.b16 %v137
    %v212 = vunpack.c.l.b16 %v138
    %v213 = vunpack.c.l.b16 %v139
    %v214 = vunpack.c.l.b16 %v140
    %v215 = vunpack.c.l.b16 %v141
    %v216 = vunpack.c.l.b16 %v142
    %v217 = vunpack.c.l.b16 %v143
    %v218 = vunpack.c.l.b16 %v144
    %v219 = vunpack.c.l.b16 %v145
    %v220 = vpack.c.b16 %v205, %v204
    %v221 = vpack.c.b16 %v207, %v206
    %v222 = vpack.c.b16 %v209, %v208
    %v223 = vpack.c.b16 %v211, %v210
    %v224 = vpack.c.b16 %v213, %v212
    %v225 = vpack.c.b16 %v215, %v214
    %v226 = vpack.c.b16 %v217, %v216
    %v227 = vpack.c.b16 %v219, %v218
    %236 = vmatpush.bf16.msra.mxu0 %v227
    %237 = vmatpush.bf16.msra.mxu0 %v226
    %238 = vmatpush.bf16.msra.mxu0 %v225
    %239 = vmatpush.bf16.msra.mxu0 %v224
    %240 = vmatpush.bf16.msra.mxu0 %v223
    %241 = vmatpush.bf16.msra.mxu0 %v222
    %242 = vmatpush.bf16.msra.mxu0 %v221
    %243 = vmatpush.bf16.msra.mxu0 %v220
    %244 = vmatmul.bf16.gmra.mxu0 %v174
    %v245 = vpop.f32.mrf.mxu0
    %v246 = vadd.f32 0.0, %v245
    %v247 = vpop.f32.mrf.mxu0
    %v248 = vadd.f32 0.0, %v247
    %249 = vmatmul.bf16.gmra.mxu0 %v175
    %v250 = vpop.f32.mrf.mxu0
    %v251 = vadd.f32 0.0, %v250
    %v252 = vpop.f32.mrf.mxu0
    %v253 = vadd.f32 0.0, %v252
    %254 = vmatmul.bf16.gmra.mxu0 %v176
    %v255 = vpop.f32.mrf.mxu0
    %v256 = vadd.f32 0.0, %v255
    %v257 = vpop.f32.mrf.mxu0
    %v258 = vadd.f32 0.0, %v257
    %259 = vmatmul.bf16.gmra.mxu0 %v177
    %v260 = vpop.f32.mrf.mxu0
    %v261 = vadd.f32 0.0, %v260
    %v262 = vpop.f32.mrf.mxu0
    %v263 = vadd.f32 0.0, %v262
    %264 = vmatmul.bf16.gmra.mxu0 %v178
    %v265 = vpop.f32.mrf.mxu0
    %v266 = vadd.f32 0.0, %v265
    %v267 = vpop.f32.mrf.mxu0
    %v268 = vadd.f32 0.0, %v267
    %269 = vmatmul.bf16.gmra.mxu0 %v179
    %v270 = vpop.f32.mrf.mxu0
    %v271 = vadd.f32 0.0, %v270
    %v272 = vpop.f32.mrf.mxu0
    %v273 = vadd.f32 0.0, %v272
    %274 = vmatmul.bf16.gmra.mxu0 %v180
    %v275 = vpop.f32.mrf.mxu0
    %v276 = vadd.f32 0.0, %v275
    %v277 = vpop.f32.mrf.mxu0
    %v278 = vadd.f32 0.0, %v277
    %279 = vdwg.mxu0
    %v280 = vadd.f32 %v102, %v246
    %v281 = vadd.f32 %v103, %v248
    %v282 = vadd.f32 %v104, %v251
    %v283 = vadd.f32 %v105, %v253
    %v284 = vadd.f32 %v106, %v256
    %v285 = vadd.f32 %v107, %v258
    %v286 = vadd.f32 %v108, %v261
    %v287 = vadd.f32 %v109, %v263
    %v288 = vadd.f32 %v110, %v266
    %v289 = vadd.f32 %v111, %v268
    %v290 = vadd.f32 %v112, %v271
    %v291 = vadd.f32 %v113, %v273
    %v292 = vadd.f32 %v114, %v276
    %v293 = vadd.f32 %v115, %v278
    %294 = vst [vmem:[#allocation2] sm:$0xff] %v280
    %295 = vst [vmem:[#allocation2 + $0x8] sm:$0xff] %v281
    %296 = vst [vmem:[#allocation2 + $0x10] sm:$0xff] %v282
    %297 = vst [vmem:[#allocation2 + $0x18] sm:$0xff] %v283
    %298 = vst [vmem:[#allocation2 + $0x20] sm:$0xff] %v284
    %299 = vst [vmem:[#allocation2 + $0x28] sm:$0xff] %v285
    %300 = vst [vmem:[#allocation2 + $0x30] sm:$0xff] %v286
    %301 = vst [vmem:[#allocation2 + $0x38] sm:$0xff] %v287
    %302 = vst [vmem:[#allocation2 + $0x40] sm:$0xff] %v288
    %303 = vst [vmem:[#allocation2 + $0x48] sm:$0xff] %v289
    %304 = vst [vmem:[#allocation2 + $0x50] sm:$0xff] %v290
    %305 = vst [vmem:[#allocation2 + $0x58] sm:$0xff] %v291
    %306 = vst [vmem:[#allocation2 + $0x60] sm:$0xff] %v292
    %307 = vst [vmem:[#allocation2 + $0x68] sm:$0xff] %v293
    // Predicated region
    $region42: #{tpu_custom_call.1} parent=1 // pred_check
      %p308 = pneg %p84
    $region43: #{tpu_custom_call.1} parent=1 // pred_check_branch
      %310 = sbr.rel (%p308) target = $region45
    $region44: #{tpu_custom_call.1} parent=1 // pred_region
      %v311 = vld [vmem:[#allocation2] sm:$0xff]
      %v312 = vld [vmem:[#allocation2 + $0x8] sm:$0xff]
      %v313 = vld [vmem:[#allocation2 + $0x10] sm:$0xff]
      %v314 = vld [vmem:[#allocation2 + $0x18] sm:$0xff]
      %v315 = vld [vmem:[#allocation2 + $0x20] sm:$0xff]
      %v316 = vld [vmem:[#allocation2 + $0x28] sm:$0xff]
      %v317 = vld [vmem:[#allocation2 + $0x30] sm:$0xff]
      %v318 = vld [vmem:[#allocation2 + $0x38] sm:$0xff]
      %v319 = vld [vmem:[#allocation2 + $0x40] sm:$0xff]
      %v320 = vld [vmem:[#allocation2 + $0x48] sm:$0xff]
      %v321 = vld [vmem:[#allocation2 + $0x50] sm:$0xff]
      %v322 = vld [vmem:[#allocation2 + $0x58] sm:$0xff]
      %v323 = vld [vmem:[#allocation2 + $0x60] sm:$0xff]
      %v324 = vld [vmem:[#allocation2 + $0x68] sm:$0xff]
      %v325 = vld [vmem:[%s2] sm:$0x1]
      %v327 = vperm.slane %v325, 0
      %v329 = vadd.f32 %v311, %v327
      %v330 = vadd.f32 %v312, %v327
      %v331 = vadd.f32 %v313, %v327
      %v332 = vadd.f32 %v314, %v327
      %v333 = vadd.f32 %v315, %v327
      %v334 = vadd.f32 %v316, %v327
      %v335 = vadd.f32 %v317, %v327
      %v336 = vadd.f32 %v318, %v327
      %v337 = vadd.f32 %v319, %v327
      %v338 = vadd.f32 %v320, %v327
      %v339 = vadd.f32 %v321, %v327
      %v340 = vadd.f32 %v322, %v327
      %v341 = vadd.f32 %v323, %v327
      %v342 = vadd.f32 %v324, %v327
      %v343 = vld [vmem:[#allocation8] sm:$0xff]
      %v344 = vld [vmem:[#allocation8 + $0x8] sm:$0xff]
      %v345 = vld [vmem:[#allocation8 + $0x10] sm:$0xff]
      %v346 = vld [vmem:[#allocation8 + $0x18] sm:$0xff]
      %v347 = vld [vmem:[#allocation8 + $0x20] sm:$0xff]
      %v348 = vld [vmem:[#allocation8 + $0x28] sm:$0xff]
      %v349 = vld [vmem:[#allocation8 + $0x30] sm:$0xff]
      %v350 = vld [vmem:[#allocation8 + $0x38] sm:$0xff]
      %v351 = vld [vmem:[#allocation8 + $0x40] sm:$0xff]
      %v352 = vld [vmem:[#allocation8 + $0x48] sm:$0xff]
      %v353 = vld [vmem:[#allocation8 + $0x50] sm:$0xff]
      %v354 = vld [vmem:[#allocation8 + $0x58] sm:$0xff]
      %v355 = vld [vmem:[#allocation8 + $0x60] sm:$0xff]
      %v356 = vld [vmem:[#allocation8 + $0x68] sm:$0xff]
      %v357 = vld [vmem:[#allocation8 + $0x70] sm:$0xff]
      %v358 = vld [vmem:[#allocation8 + $0x78] sm:$0xff]
      %v359 = vld [vmem:[#allocation9] sm:$0xff]
      %v360 = vld [vmem:[#allocation9 + $0x8] sm:$0xff]
      %v361 = vld [vmem:[#allocation9 + $0x10] sm:$0xff]
      %v362 = vld [vmem:[#allocation9 + $0x18] sm:$0xff]
      %v363 = vld [vmem:[#allocation9 + $0x20] sm:$0xff]
      %v364 = vld [vmem:[#allocation9 + $0x28] sm:$0xff]
      %v365 = vld [vmem:[#allocation9 + $0x30] sm:$0xff]
      %v366 = vld [vmem:[#allocation9 + $0x38] sm:$0xff]
      %v367 = vld [vmem:[#allocation9 + $0x40] sm:$0xff]
      %v368 = vld [vmem:[#allocation9 + $0x48] sm:$0xff]
      %v369 = vld [vmem:[#allocation9 + $0x50] sm:$0xff]
      %v370 = vld [vmem:[#allocation9 + $0x58] sm:$0xff]
      %v371 = vld [vmem:[#allocation9 + $0x60] sm:$0xff]
      %v372 = vld [vmem:[#allocation9 + $0x68] sm:$0xff]
      %v373 = vld [vmem:[#allocation9 + $0x70] sm:$0xff]
      %v374 = vld [vmem:[#allocation9 + $0x78] sm:$0xff]
      %v375 = vmul.f32 %v329, %v329
      %v376 = vmul.f32 %v330, %v330
      %v377 = vmul.f32 %v331, %v331
      %v378 = vmul.f32 %v332, %v332
      %v379 = vmul.f32 %v333, %v333
      %v380 = vmul.f32 %v334, %v334
      %v381 = vmul.f32 %v335, %v335
      %v382 = vmul.f32 %v336, %v336
      %v383 = vmul.f32 %v337, %v337
      %v384 = vmul.f32 %v338, %v338
      %v385 = vmul.f32 %v339, %v339
      %v386 = vmul.f32 %v340, %v340
      %v387 = vmul.f32 %v341, %v341
      %v388 = vmul.f32 %v342, %v342
      %389 = vmatpush.msra.mxu0 %v358
      %390 = vmatpush.msra.mxu0 %v357
      %391 = vmatpush.msra.mxu0 %v356
      %392 = vmatpush.msra.mxu0 %v355
      %393 = vmatpush.msra.mxu0 %v354
      %394 = vmatpush.msra.mxu0 %v353
      %395 = vmatpush.msra.mxu0 %v352
      %396 = vmatpush.msra.mxu0 %v351
      %397 = vmatpush.msra.mxu0 %v350
      %398 = vmatpush.msra.mxu0 %v349
      %399 = vmatpush.msra.mxu0 %v348
      %400 = vmatpush.msra.mxu0 %v347
      %401 = vmatpush.msra.mxu0 %v346
      %402 = vmatpush.msra.mxu0 %v345
      %403 = vmatpush.msra.mxu0 %v344
      %404 = vmatpush.msra.mxu0 %v343
      %405 = vmatmul.f32.gmra.mxu0 %v375
      %v406 = vpop.f32.mrf.mxu0
      %v407 = vadd.f32 0.0, %v406
      %408 = vmatmul.f32.gmra.mxu0 %v376
      %v409 = vpop.f32.mrf.mxu0
      %v410 = vadd.f32 0.0, %v409
      %411 = vmatmul.f32.gmra.mxu0 %v377
      %v412 = vpop.f32.mrf.mxu0
      %v413 = vadd.f32 0.0, %v412
      %414 = vmatmul.f32.gmra.mxu0 %v378
      %v415 = vpop.f32.mrf.mxu0
      %v416 = vadd.f32 0.0, %v415
      %417 = vmatmul.f32.gmra.mxu0 %v379
      %v418 = vpop.f32.mrf.mxu0
      %v419 = vadd.f32 0.0, %v418
      %420 = vmatmul.f32.gmra.mxu0 %v380
      %v421 = vpop.f32.mrf.mxu0
      %v422 = vadd.f32 0.0, %v421
      %423 = vmatmul.f32.gmra.mxu0 %v381
      %v424 = vpop.f32.mrf.mxu0
      %v425 = vadd.f32 0.0, %v424
      %426 = vmatmul.f32.gmra.mxu0 %v382
      %v427 = vpop.f32.mrf.mxu0
      %v428 = vadd.f32 0.0, %v427
      %429 = vmatmul.f32.gmra.mxu0 %v383
      %v430 = vpop.f32.mrf.mxu0
      %v431 = vadd.f32 0.0, %v430
      %432 = vmatmul.f32.gmra.mxu0 %v384
      %v433 = vpop.f32.mrf.mxu0
      %v434 = vadd.f32 0.0, %v433
      %435 = vmatmul.f32.gmra.mxu0 %v385
      %v436 = vpop.f32.mrf.mxu0
      %v437 = vadd.f32 0.0, %v436
      %438 = vmatmul.f32.gmra.mxu0 %v386
      %v439 = vpop.f32.mrf.mxu0
      %v440 = vadd.f32 0.0, %v439
      %441 = vmatmul.f32.gmra.mxu0 %v387
      %v442 = vpop.f32.mrf.mxu0
      %v443 = vadd.f32 0.0, %v442
      %444 = vmatmul.f32.gmra.mxu0 %v388
      %v445 = vpop.f32.mrf.mxu0
      %v446 = vadd.f32 0.0, %v445
      %447 = vdwg.mxu0
      %v448 = vadd.f32 %v407, 1.0
      %v449 = vadd.f32 %v410, 1.0
      %v450 = vadd.f32 %v413, 1.0
      %v451 = vadd.f32 %v416, 1.0
      %v452 = vadd.f32 %v419, 1.0
      %v453 = vadd.f32 %v422, 1.0
      %v454 = vadd.f32 %v425, 1.0
      %v455 = vadd.f32 %v428, 1.0
      %v456 = vadd.f32 %v431, 1.0
      %v457 = vadd.f32 %v434, 1.0
      %v458 = vadd.f32 %v437, 1.0
      %v459 = vadd.f32 %v440, 1.0
      %v460 = vadd.f32 %v443, 1.0
      %v461 = vadd.f32 %v446, 1.0
      %v462 = vrcp.pop %v448
      %v463 = vrcp.pop %v449
      %v464 = vrcp.pop %v450
      %v465 = vrcp.pop %v451
      %v466 = vrcp.pop %v452
      %v467 = vrcp.pop %v453
      %v468 = vrcp.pop %v454
      %v469 = vrcp.pop %v455
      %v470 = vrcp.pop %v456
      %v471 = vrcp.pop %v457
      %v472 = vrcp.pop %v458
      %v473 = vrcp.pop %v459
      %v474 = vrcp.pop %v460
      %v475 = vrcp.pop %v461
      %v476 = vmul.f32 %v407, %v462
      %v477 = vmul.f32 %v410, %v463
      %v478 = vmul.f32 %v413, %v464
      %v479 = vmul.f32 %v416, %v465
      %v480 = vmul.f32 %v419, %v466
      %v481 = vmul.f32 %v422, %v467
      %v482 = vmul.f32 %v425, %v468
      %v483 = vmul.f32 %v428, %v469
      %v484 = vmul.f32 %v431, %v470
      %v485 = vmul.f32 %v434, %v471
      %v486 = vmul.f32 %v437, %v472
      %v487 = vmul.f32 %v440, %v473
      %v488 = vmul.f32 %v443, %v474
      %v489 = vmul.f32 %v446, %v475
      %v490 = vadd.f32 %v407, 1e-12
      %v491 = vadd.f32 %v410, 1e-12
      %v492 = vadd.f32 %v413, 1e-12
      %v493 = vadd.f32 %v416, 1e-12
      %v494 = vadd.f32 %v419, 1e-12
      %v495 = vadd.f32 %v422, 1e-12
      %v496 = vadd.f32 %v425, 1e-12
      %v497 = vadd.f32 %v428, 1e-12
      %v498 = vadd.f32 %v431, 1e-12
      %v499 = vadd.f32 %v434, 1e-12
      %v500 = vadd.f32 %v437, 1e-12
      %v501 = vadd.f32 %v440, 1e-12
      %v502 = vadd.f32 %v443, 1e-12
      %v503 = vadd.f32 %v446, 1e-12
      %v504 = vrsqrt.pop %v490
      %v505 = vmul.f32 %v504, %v490
      %v506 = vmul.f32 %v505, %v504
      %v507 = vmul.f32 0.5, %v506
      %v508 = vsub.f32 1.5, %v507
      %v509 = vmul.f32 %v504, %v508
      %vm510 = vweird.f32 %v490
      %vm511 = vweird.f32 %v504
      %vm512 = vmor %vm510, %vm511
      %v513 = vsel %vm512, %v504, %v509
      %v514 = vrsqrt.pop %v491
      %v515 = vmul.f32 %v514, %v491
      %v516 = vmul.f32 %v515, %v514
      %v517 = vmul.f32 0.5, %v516
      %v518 = vsub.f32 1.5, %v517
      %v519 = vmul.f32 %v514, %v518
      %vm520 = vweird.f32 %v491
      %vm521 = vweird.f32 %v514
      %vm522 = vmor %vm520, %vm521
      %v523 = vsel %vm522, %v514, %v519
      %v524 = vrsqrt.pop %v492
      %v525 = vmul.f32 %v524, %v492
      %v526 = vmul.f32 %v525, %v524
      %v527 = vmul.f32 0.5, %v526
      %v528 = vsub.f32 1.5, %v527
      %v529 = vmul.f32 %v524, %v528
      %vm530 = vweird.f32 %v492
      %vm531 = vweird.f32 %v524
      %vm532 = vmor %vm530, %vm531
      %v533 = vsel %vm532, %v524, %v529
      %v534 = vrsqrt.pop %v493
      %v535 = vmul.f32 %v534, %v493
      %v536 = vmul.f32 %v535, %v534
      %v537 = vmul.f32 0.5, %v536
      %v538 = vsub.f32 1.5, %v537
      %v539 = vmul.f32 %v534, %v538
      %vm540 = vweird.f32 %v493
      %vm541 = vweird.f32 %v534
      %vm542 = vmor %vm540, %vm541
      %v543 = vsel %vm542, %v534, %v539
      %v544 = vrsqrt.pop %v494
      %v545 = vmul.f32 %v544, %v494
      %v546 = vmul.f32 %v545, %v544
      %v547 = vmul.f32 0.5, %v546
      %v548 = vsub.f32 1.5, %v547
      %v549 = vmul.f32 %v544, %v548
      %vm550 = vweird.f32 %v494
      %vm551 = vweird.f32 %v544
      %vm552 = vmor %vm550, %vm551
      %v553 = vsel %vm552, %v544, %v549
      %v554 = vrsqrt.pop %v495
      %v555 = vmul.f32 %v554, %v495
      %v556 = vmul.f32 %v555, %v554
      %v557 = vmul.f32 0.5, %v556
      %v558 = vsub.f32 1.5, %v557
      %v559 = vmul.f32 %v554, %v558
      %vm560 = vweird.f32 %v495
      %vm561 = vweird.f32 %v554
      %vm562 = vmor %vm560, %vm561
      %v563 = vsel %vm562, %v554, %v559
      %v564 = vrsqrt.pop %v496
      %v565 = vmul.f32 %v564, %v496
      %v566 = vmul.f32 %v565, %v564
      %v567 = vmul.f32 0.5, %v566
      %v568 = vsub.f32 1.5, %v567
      %v569 = vmul.f32 %v564, %v568
      %vm570 = vweird.f32 %v496
      %vm571 = vweird.f32 %v564
      %vm572 = vmor %vm570, %vm571
      %v573 = vsel %vm572, %v564, %v569
      %v574 = vrsqrt.pop %v497
      %v575 = vmul.f32 %v574, %v497
      %v576 = vmul.f32 %v575, %v574
      %v577 = vmul.f32 0.5, %v576
      %v578 = vsub.f32 1.5, %v577
      %v579 = vmul.f32 %v574, %v578
      %vm580 = vweird.f32 %v497
      %vm581 = vweird.f32 %v574
      %vm582 = vmor %vm580, %vm581
      %v583 = vsel %vm582, %v574, %v579
      %v584 = vrsqrt.pop %v498
      %v585 = vmul.f32 %v584, %v498
      %v586 = vmul.f32 %v585, %v584
      %v587 = vmul.f32 0.5, %v586
      %v588 = vsub.f32 1.5, %v587
      %v589 = vmul.f32 %v584, %v588
      %vm590 = vweird.f32 %v498
      %vm591 = vweird.f32 %v584
      %vm592 = vmor %vm590, %vm591
      %v593 = vsel %vm592, %v584, %v589
      %v594 = vrsqrt.pop %v499
      %v595 = vmul.f32 %v594, %v499
      %v596 = vmul.f32 %v595, %v594
      %v597 = vmul.f32 0.5, %v596
      %v598 = vsub.f32 1.5, %v597
      %v599 = vmul.f32 %v594, %v598
      %vm600 = vweird.f32 %v499
      %vm601 = vweird.f32 %v594
      %vm602 = vmor %vm600, %vm601
      %v603 = vsel %vm602, %v594, %v599
      %v604 = vrsqrt.pop %v500
      %v605 = vmul.f32 %v604, %v500
      %v606 = vmul.f32 %v605, %v604
      %v607 = vmul.f32 0.5, %v606
      %v608 = vsub.f32 1.5, %v607
      %v609 = vmul.f32 %v604, %v608
      %vm610 = vweird.f32 %v500
      %vm611 = vweird.f32 %v604
      %vm612 = vmor %vm610, %vm611
      %v613 = vsel %vm612, %v604, %v609
      %v614 = vrsqrt.pop %v501
      %v615 = vmul.f32 %v614, %v501
      %v616 = vmul.f32 %v615, %v614
      %v617 = vmul.f32 0.5, %v616
      %v618 = vsub.f32 1.5, %v617
      %v619 = vmul.f32 %v614, %v618
      %vm620 = vweird.f32 %v501
      %vm621 = vweird.f32 %v614
      %vm622 = vmor %vm620, %vm621
      %v623 = vsel %vm622, %v614, %v619
      %v624 = vrsqrt.pop %v502
      %v625 = vmul.f32 %v624, %v502
      %v626 = vmul.f32 %v625, %v624
      %v627 = vmul.f32 0.5, %v626
      %v628 = vsub.f32 1.5, %v627
      %v629 = vmul.f32 %v624, %v628
      %vm630 = vweird.f32 %v502
      %vm631 = vweird.f32 %v624
      %vm632 = vmor %vm630, %vm631
      %v633 = vsel %vm632, %v624, %v629
      %v634 = vrsqrt.pop %v503
      %v635 = vmul.f32 %v634, %v503
      %v636 = vmul.f32 %v635, %v634
      %v637 = vmul.f32 0.5, %v636
      %v638 = vsub.f32 1.5, %v637
      %v639 = vmul.f32 %v634, %v638
      %vm640 = vweird.f32 %v503
      %vm641 = vweird.f32 %v634
      %vm642 = vmor %vm640, %vm641
      %v643 = vsel %vm642, %v634, %v639
      %v644 = vmul.f32 %v476, %v513
      %v645 = vmul.f32 %v477, %v523
      %v646 = vmul.f32 %v478, %v533
      %v647 = vmul.f32 %v479, %v543
      %v648 = vmul.f32 %v480, %v553
      %v649 = vmul.f32 %v481, %v563
      %v650 = vmul.f32 %v482, %v573
      %v651 = vmul.f32 %v483, %v583
      %v652 = vmul.f32 %v484, %v593
      %v653 = vmul.f32 %v485, %v603
      %v654 = vmul.f32 %v486, %v613
      %v655 = vmul.f32 %v487, %v623
      %v656 = vmul.f32 %v488, %v633
      %v657 = vmul.f32 %v489, %v643
      %658 = vmatpush.msra.mxu0 %v374
      %659 = vmatpush.msra.mxu0 %v373
      %660 = vmatpush.msra.mxu0 %v372
      %661 = vmatpush.msra.mxu0 %v371
      %662 = vmatpush.msra.mxu0 %v370
      %663 = vmatpush.msra.mxu0 %v369
      %664 = vmatpush.msra.mxu0 %v368
      %665 = vmatpush.msra.mxu0 %v367
      %666 = vmatpush.msra.mxu0 %v366
      %667 = vmatpush.msra.mxu0 %v365
      %668 = vmatpush.msra.mxu0 %v364
      %669 = vmatpush.msra.mxu0 %v363
      %670 = vmatpush.msra.mxu0 %v362
      %671 = vmatpush.msra.mxu0 %v361
      %672 = vmatpush.msra.mxu0 %v360
      %673 = vmatpush.msra.mxu0 %v359
      %674 = vmatmul.f32.gmra.mxu0 %v644
      %v675 = vpop.f32.mrf.mxu0
      %v676 = vadd.f32 0.0, %v675
      %677 = vmatmul.f32.gmra.mxu0 %v645
      %v678 = vpop.f32.mrf.mxu0
      %v679 = vadd.f32 0.0, %v678
      %680 = vmatmul.f32.gmra.mxu0 %v646
      %v681 = vpop.f32.mrf.mxu0
      %v682 = vadd.f32 0.0, %v681
      %683 = vmatmul.f32.gmra.mxu0 %v647
      %v684 = vpop.f32.mrf.mxu0
      %v685 = vadd.f32 0.0, %v684
      %686 = vmatmul.f32.gmra.mxu0 %v648
      %v687 = vpop.f32.mrf.mxu0
      %v688 = vadd.f32 0.0, %v687
      %689 = vmatmul.f32.gmra.mxu0 %v649
      %v690 = vpop.f32.mrf.mxu0
      %v691 = vadd.f32 0.0, %v690
      %692 = vmatmul.f32.gmra.mxu0 %v650
      %v693 = vpop.f32.mrf.mxu0
      %v694 = vadd.f32 0.0, %v693
      %695 = vmatmul.f32.gmra.mxu0 %v651
      %v696 = vpop.f32.mrf.mxu0
      %v697 = vadd.f32 0.0, %v696
      %698 = vmatmul.f32.gmra.mxu0 %v652
      %v699 = vpop.f32.mrf.mxu0
      %v700 = vadd.f32 0.0, %v699
      %701 = vmatmul.f32.gmra.mxu0 %v653
      %v702 = vpop.f32.mrf.mxu0
      %v703 = vadd.f32 0.0, %v702
      %704 = vmatmul.f32.gmra.mxu0 %v654
      %v705 = vpop.f32.mrf.mxu0
      %v706 = vadd.f32 0.0, %v705
      %707 = vmatmul.f32.gmra.mxu0 %v655
      %v708 = vpop.f32.mrf.mxu0
      %v709 = vadd.f32 0.0, %v708
      %710 = vmatmul.f32.gmra.mxu0 %v656
      %v711 = vpop.f32.mrf.mxu0
      %v712 = vadd.f32 0.0, %v711
      %713 = vmatmul.f32.gmra.mxu0 %v657
      %v714 = vpop.f32.mrf.mxu0
      %v715 = vadd.f32 0.0, %v714
      %716 = vdwg.mxu0
      %v717 = vmul.f32 %v476, 1e-09
      %v718 = vmul.f32 %v477, 1e-09
      %v719 = vmul.f32 %v478, 1e-09
      %v720 = vmul.f32 %v479, 1e-09
      %v721 = vmul.f32 %v480, 1e-09
      %v722 = vmul.f32 %v481, 1e-09
      %v723 = vmul.f32 %v482, 1e-09
      %v724 = vmul.f32 %v483, 1e-09
      %v725 = vmul.f32 %v484, 1e-09
      %v726 = vmul.f32 %v485, 1e-09
      %v727 = vmul.f32 %v486, 1e-09
      %v728 = vmul.f32 %v487, 1e-09
      %v729 = vmul.f32 %v488, 1e-09
      %v730 = vmul.f32 %v489, 1e-09
      %731 = vmatpush.msra.mxu0 %v374
      %732 = vmatpush.msra.mxu0 %v373
      %733 = vmatpush.msra.mxu0 %v372
      %734 = vmatpush.msra.mxu0 %v371
      %735 = vmatpush.msra.mxu0 %v370
      %736 = vmatpush.msra.mxu0 %v369
      %737 = vmatpush.msra.mxu0 %v368
      %738 = vmatpush.msra.mxu0 %v367
      %739 = vmatpush.msra.mxu0 %v366
      %740 = vmatpush.msra.mxu0 %v365
      %741 = vmatpush.msra.mxu0 %v364
      %742 = vmatpush.msra.mxu0 %v363
      %743 = vmatpush.msra.mxu0 %v362
      %744 = vmatpush.msra.mxu0 %v361
      %745 = vmatpush.msra.mxu0 %v360
      %746 = vmatpush.msra.mxu0 %v359
      %747 = vmatmul.f32.gmra.mxu0 %v717
      %v748 = vpop.f32.mrf.mxu0
      %v749 = vadd.f32 0.0, %v748
      %750 = vmatmul.f32.gmra.mxu0 %v718
      %v751 = vpop.f32.mrf.mxu0
      %v752 = vadd.f32 0.0, %v751
      %753 = vmatmul.f32.gmra.mxu0 %v719
      %v754 = vpop.f32.mrf.mxu0
      %v755 = vadd.f32 0.0, %v754
      %756 = vmatmul.f32.gmra.mxu0 %v720
      %v757 = vpop.f32.mrf.mxu0
      %v758 = vadd.f32 0.0, %v757
      %759 = vmatmul.f32.gmra.mxu0 %v721
      %v760 = vpop.f32.mrf.mxu0
      %v761 = vadd.f32 0.0, %v760
      %762 = vmatmul.f32.gmra.mxu0 %v722
      %v763 = vpop.f32.mrf.mxu0
      %v764 = vadd.f32 0.0, %v763
      %765 = vmatmul.f32.gmra.mxu0 %v723
      %v766 = vpop.f32.mrf.mxu0
      %v767 = vadd.f32 0.0, %v766
      %768 = vmatmul.f32.gmra.mxu0 %v724
      %v769 = vpop.f32.mrf.mxu0
      %v770 = vadd.f32 0.0, %v769
      %771 = vmatmul.f32.gmra.mxu0 %v725
      %v772 = vpop.f32.mrf.mxu0
      %v773 = vadd.f32 0.0, %v772
      %774 = vmatmul.f32.gmra.mxu0 %v726
      %v775 = vpop.f32.mrf.mxu0
      %v776 = vadd.f32 0.0, %v775
      %777 = vmatmul.f32.gmra.mxu0 %v727
      %v778 = vpop.f32.mrf.mxu0
      %v779 = vadd.f32 0.0, %v778
      %780 = vmatmul.f32.gmra.mxu0 %v728
      %v781 = vpop.f32.mrf.mxu0
      %v782 = vadd.f32 0.0, %v781
      %783 = vmatmul.f32.gmra.mxu0 %v729
      %v784 = vpop.f32.mrf.mxu0
      %v785 = vadd.f32 0.0, %v784
      %786 = vmatmul.f32.gmra.mxu0 %v730
      %v787 = vpop.f32.mrf.mxu0
      %v788 = vadd.f32 0.0, %v787
      %789 = vdwg.mxu0
      %v790 = vmul.f32 %v329, %v676
      %v791 = vmul.f32 %v330, %v679
      %v792 = vmul.f32 %v331, %v682
      %v793 = vmul.f32 %v332, %v685
      %v794 = vmul.f32 %v333, %v688
      %v795 = vmul.f32 %v334, %v691
      %v796 = vmul.f32 %v335, %v694
      %v797 = vmul.f32 %v336, %v697
      %v798 = vmul.f32 %v337, %v700
      %v799 = vmul.f32 %v338, %v703
      %v800 = vmul.f32 %v339, %v706
      %v801 = vmul.f32 %v340, %v709
      %v802 = vmul.f32 %v341, %v712
      %v803 = vmul.f32 %v342, %v715
      %v804 = vadd.f32 %v790, %v749
      %v805 = vadd.f32 %v791, %v752
      %v806 = vadd.f32 %v792, %v755
      %v807 = vadd.f32 %v793, %v758
      %v808 = vadd.f32 %v794, %v761
      %v809 = vadd.f32 %v795, %v764
      %v810 = vadd.f32 %v796, %v767
      %v811 = vadd.f32 %v797, %v770
      %v812 = vadd.f32 %v798, %v773
      %v813 = vadd.f32 %v799, %v776
      %v814 = vadd.f32 %v800, %v779
      %v815 = vadd.f32 %v801, %v782
      %v816 = vadd.f32 %v802, %v785
      %v817 = vadd.f32 %v803, %v788
      %818 = vst [vmem:[#allocation11] sm:$0xff] %v804
      %819 = vst [vmem:[#allocation11 + $0x8] sm:$0xff] %v805
      %820 = vst [vmem:[#allocation11 + $0x10] sm:$0xff] %v806
      %821 = vst [vmem:[#allocation11 + $0x18] sm:$0xff] %v807
      %822 = vst [vmem:[#allocation11 + $0x20] sm:$0xff] %v808
      %823 = vst [vmem:[#allocation11 + $0x28] sm:$0xff] %v809
      %824 = vst [vmem:[#allocation11 + $0x30] sm:$0xff] %v810
      %825 = vst [vmem:[#allocation11 + $0x38] sm:$0xff] %v811
      %826 = vst [vmem:[#allocation11 + $0x40] sm:$0xff] %v812
      %827 = vst [vmem:[#allocation11 + $0x48] sm:$0xff] %v813
      %828 = vst [vmem:[#allocation11 + $0x50] sm:$0xff] %v814
      %829 = vst [vmem:[#allocation11 + $0x58] sm:$0xff] %v815
      %830 = vst [vmem:[#allocation11 + $0x60] sm:$0xff] %v816
      %831 = vst [vmem:[#allocation11 + $0x68] sm:$0xff] %v817
    $region45: #{tpu_custom_call.1} parent=1 // pred_fallthru
      _
    // Predicated region
    $region46: #{tpu_custom_call.1} parent=1 // pred_check
      _
    $region47: #{tpu_custom_call.1} parent=1 // pred_check_branch
      %833 = sbr.rel (0) target = $region49
    $region48: #{tpu_custom_call.1} parent=1 // pred_region
      %835 = vsyncadd [#allocation5], 0
      %s836 = sshll.u32 [#allocation11], 4
      %s837 = int_to_ptr.vmem [resolvable:$true] %s836
      %s838 = sshll.u32 %s5, 4
      %s839 = int_to_ptr.hbm [resolvable:$true] %s838
      %844 = dma.vmem_to_hbm [thread:$0]  %s837, 1792, %s839, [#allocation5], 128, 128, 8
    $region49: #{tpu_custom_call.1} parent=1 // pred_fallthru
      _
    // Predicated region
    $region50: #{tpu_custom_call.1} parent=1 // pred_check
      _
    $region51: #{tpu_custom_call.1} parent=1 // pred_check_branch
      %846 = sbr.rel (0) target = $region53
    $region52: #{tpu_custom_call.1} parent=1 // pred_region
      %848 = dma.done [#allocation5], 1792
    $region53: #{tpu_custom_call.1} parent=1 // pred_fallthru
      _
    %849 = vsyncpa [#allocation4], 1
    %850 = vsyncpa [#allocation7], 1
    %851 = vsyncpa [#allocation10], 1
    %852 = vsyncpa [#allocation5], 1

</llo_original>
